<compile_context>
chip_gen: v7x
topology: tpu7x:2x2x1
jax: 0.10.0
libtpu: 0.0.40
codegen_flags: <defaults>
</compile_context>

<pallas_src>
import functools

import jax
import jax.numpy as jnp
from jax.experimental import pallas as pl
from jax.experimental.pallas import tpu as pltpu


def _round_up(x, m):
    return (x + m - 1) // m * m


def _pad_gates_last(w, h, hp):
    """Pad a (..., 3*h) gate-blocked ([r|z|n]) array to (..., 3*hp), zero-filled per gate."""
    if hp == h:
        return w
    pad = [(0, 0)] * (w.ndim - 1) + [(0, hp - h)]
    parts = [jnp.pad(w[..., g * h:(g + 1) * h], pad) for g in range(3)]
    return jnp.concatenate(parts, axis=-1)


# ----------------------------- recurrent kernel -----------------------------------------

def _make_gru_kernel(hp, btile, time_chunk, unroll):
    """Recurrence-only kernel: consumes precomputed Gx chunks, keeps h resident in VMEM."""

    def kernel(gx_ref, wh_ref, bh_ref, hid_ref, h_scratch):
        c = pl.program_id(1)                      # time-chunk axis (inner, sequential)

        @pl.when(c == 0)
        def _():
            h_scratch[...] = jnp.zeros_like(h_scratch)

        # Hoisted out of the unrolled loop: weight load + bias broadcast (JAX does not CSE
        # broadcast_in_dim, so materialize the (Btile, 3Hp) bias once per chunk).
        wh = wh_ref[...]                                              # (Hp, 3Hp) f32, resident
        bh = jnp.broadcast_to(bh_ref[...], (btile, 3 * hp))           # (Btile, 3Hp) f32

        def step(i, h):                           # h: (Btile, Hp) f32 carried in vregs
            gx = gx_ref[i].astype(jnp.float32)    # (Btile, 3Hp): streamed bf16 -> f32
            gh = jnp.dot(h, wh, preferred_element_type=jnp.float32) + bh
            r = jax.nn.sigmoid(gx[:, 0:hp] + gh[:, 0:hp])
            z = jax.nn.sigmoid(gx[:, hp:2 * hp] + gh[:, hp:2 * hp])
            n = jnp.tanh(gx[:, 2 * hp:3 * hp] + r * gh[:, 2 * hp:3 * hp])
            return (1.0 - z) * n + z * h

        h = jax.lax.fori_loop(0, time_chunk, step, h_scratch[...], unroll=unroll)
        h_scratch[...] = h

        @pl.when(c == pl.num_programs(1) - 1)
        def _():
            hid_ref[...] = h

    return kernel


# ----------------------------- output projection kernel ---------------------------------

def _proj_kernel(h_ref, w_ref, b_ref, out_ref):
    # Wout is stored bf16 (halved HBM stream); dot runs in f32 for portability/accuracy.
    out_ref[...] = (
        jnp.dot(h_ref[...], w_ref[...].astype(jnp.float32),
                preferred_element_type=jnp.float32)
        + b_ref[...])


# ----------------------------- host wrapper ----------------------------------------------

@functools.partial(jax.jit, static_argnames=("gx_vmem_bytes", "batch_tile"))
def gru_model_forward(tokens, params, *, gx_vmem_bytes=8 << 20, batch_tile=64):
    """tokens: int32 (B, T).  Returns (logits (B, V), hidden (1, B, H))."""
    emb = params["embedding"]                      # (V, E) f32
    wx, wh = params["wx"], params["wh"]            # (E, 3H), (H, 3H), gate order [r, z, n]
    bx, bh = params["bx"], params["bh"]            # (1, 3H)
    wout, bout = params["wout"], params["bout"]    # (H, V), (1, V)

    B, T = tokens.shape
    V, E = emb.shape
    H = wh.shape[0]

    BSUB = 16                                      # sublane alignment for the bf16 gx stream
    Hp = _round_up(H, 128)                         # lane alignment -> gate slices full vregs
    Vp = _round_up(V, 128)

    Bp0 = _round_up(B, BSUB)
    Btile = min(Bp0, _round_up(min(batch_tile, Bp0), BSUB))
    Bp = _round_up(Bp0, Btile)
    n_btiles = Bp // Btile

    # Time-chunk size from a VMEM budget (double-buffered bf16 gx stream per batch tile);
    # amortizes the ~0.35us/grid-step overhead without overshooting v7x's 64 MiB VMEM.
    bytes_per_step = 2 * Btile * 3 * Hp * 2        # double-buffer x bf16
    Tc = max(1, min(T, gx_vmem_bytes // bytes_per_step, 256))
    n_chunks = pl.cdiv(T, Tc)
    Tp = n_chunks * Tc
    unroll = min(8, Tc)                            # bounded unroll: scheduler visibility, no spills

    # ---- gate-aligned, lane-padded parameters (f32 for all dot operands) ----
    wx_p = _pad_gates_last(wx, H, Hp)                                              # (E, 3Hp) f32
    wh_p = jnp.pad(_pad_gates_last(wh, H, Hp), ((0, Hp - H), (0, 0)))              # (Hp, 3Hp) f32
    bx_p = _pad_gates_last(bx, H, Hp)                                              # (1, 3Hp) f32
    bh_p = _pad_gates_last(bh, H, Hp)                                              # (1, 3Hp) f32
    wout_p = jnp.pad(wout, ((0, Hp - H), (0, Vp - V))).astype(jnp.bfloat16)        # (Hp, Vp) bf16
    bout_p = jnp.pad(bout, ((0, 0), (0, Vp - V)))                                  # (1, Vp) f32

    # ---- hoisted input projection: ONE large MXU matmul for all time steps ----
    # Tokens are padded first so the einsum emits gx already padded and time-major:
    # no separate full-array pad/transpose pass over the largest intermediate.
    tok_p = jnp.pad(tokens, ((0, Bp - B), (0, Tp - T)))                            # (Bp, Tp)
    x_emb = jnp.take(emb, tok_p, axis=0)                                           # (Bp, Tp, E)
    gx = jnp.einsum("bte,eg->tbg", x_emb, wx_p,
                    preferred_element_type=jnp.float32) + bx_p                     # (Tp, Bp, 3Hp)

    if Tp > T:
        # Padded tail timesteps: saturate the z gate so h_new == h exactly; this removes the
        # per-step compare+select from the serial critical path inside the kernel.
        gx = gx.at[T:, :, Hp:2 * Hp].set(1e4)

    gx = gx.astype(jnp.bfloat16)                   # streamed tensor only: halve DMA bytes

    # ---- recurrent kernel: grid = (batch tiles [parallel], time chunks [sequential]) ----
    gru_kernel = _make_gru_kernel(Hp, Btile, Tc, unroll)
    h_final = pl.pallas_call(
        gru_kernel,
        out_shape=jax.ShapeDtypeStruct((Bp, Hp), jnp.float32),
        grid_spec=pltpu.PrefetchScalarGridSpec(
            num_scalar_prefetch=0,
            grid=(n_btiles, n_chunks),
            in_specs=[
                pl.BlockSpec((Tc, Btile, 3 * Hp), lambda b, c: (c, b, 0)),   # Gx chunk (bf16)
                pl.BlockSpec((Hp, 3 * Hp), lambda b, c: (0, 0)),             # Wh (f32, resident)
                pl.BlockSpec((1, 3 * Hp), lambda b, c: (0, 0)),              # bh
            ],
            out_specs=pl.BlockSpec((Btile, Hp), lambda b, c: (b, 0)),        # final hidden
            scratch_shapes=[pltpu.VMEM((Btile, Hp), jnp.float32)],           # f32 carry
        ),
        compiler_params=pltpu.CompilerParams(
            dimension_semantics=("parallel", "arbitrary")),                  # batch || , time seq
    )(gx, wh_p, bh_p)

    # ---- final projection as its own tiled kernel (keeps Wout out of the recurrence) ----
    TV = 128
    for cand in (2048, 1024, 512, 256):
        if Vp % cand == 0:
            TV = cand
            break
    logits_p = pl.pallas_call(
        _proj_kernel,
        out_shape=jax.ShapeDtypeStruct((Bp, Vp), jnp.float32),
        grid_spec=pltpu.PrefetchScalarGridSpec(
            num_scalar_prefetch=0,
            grid=(Vp // TV,),
            in_specs=[
                pl.BlockSpec((Bp, Hp), lambda j: (0, 0)),
                pl.BlockSpec((Hp, TV), lambda j: (0, j)),
                pl.BlockSpec((1, TV), lambda j: (0, j)),
            ],
            out_specs=pl.BlockSpec((Bp, TV), lambda j: (0, j)),
        ),
        compiler_params=pltpu.CompilerParams(
            dimension_semantics=("parallel",)),
    )(h_final, wout_p, bout_p)

    logits = logits_p[:B, :V]
    hidden = h_final[:B, :H][None, :, :]          # (num_layers=1, B, H) like PyTorch
    return logits, hidden


# ----------------------------- pure-JAX reference (f32) ----------------------------------

def reference_forward(tokens, params):
    emb = params["embedding"]
    wx, wh, bx, bh = params["wx"], params["wh"], params["bx"], params["bh"]
    wout, bout = params["wout"], params["bout"]
    H = wh.shape[0]

    x = jnp.take(emb, tokens, axis=0)               # (B, T, E)
    B = x.shape[0]

    def step(h, x_t):
        gx = x_t @ wx + bx
        gh = h @ wh + bh
        r = jax.nn.sigmoid(gx[:, :H] + gh[:, :H])
        z = jax.nn.sigmoid(gx[:, H:2 * H] + gh[:, H:2 * H])
        n = jnp.tanh(gx[:, 2 * H:] + r * gh[:, 2 * H:])
        h_new = (1.0 - z) * n + z * h
        return h_new, None

    h0 = jnp.zeros((B, H), jnp.float32)
    h_final, _ = jax.lax.scan(step, h0, jnp.transpose(x, (1, 0, 2)))
    logits = h_final @ wout + bout
    return logits, h_final[None]


def make_params(key, vocab_size, embed_size, hidden_size):
    ks = jax.random.split(key, 7)
    s = 0.1
    return {
        "embedding": s * jax.random.normal(ks[0], (vocab_size, embed_size), jnp.float32),
        # PyTorch weight_ih_l0 is (3H, E); stored transposed (E, 3H), gate order [r, z, n]
        "wx": s * jax.random.normal(ks[1], (embed_size, 3 * hidden_size), jnp.float32),
        "wh": s * jax.random.normal(ks[2], (hidden_size, 3 * hidden_size), jnp.float32),
        "bx": s * jax.random.normal(ks[3], (1, 3 * hidden_size), jnp.float32),
        "bh": s * jax.random.normal(ks[4], (1, 3 * hidden_size), jnp.float32),
        "wout": s * jax.random.normal(ks[5], (hidden_size, vocab_size), jnp.float32),
        "bout": s * jax.random.normal(ks[6], (1, vocab_size), jnp.float32),
    }


if __name__ == "__main__":
    vocab_size, embed_size, hidden_size = 32, 16, 32
    B, T = 2, 8

    key = jax.random.PRNGKey(0)
    k_tok, k_par = jax.random.split(key)
    tokens = jax.random.randint(k_tok, (B, T), 0, vocab_size, dtype=jnp.int32)
    params = make_params(k_par, vocab_size, embed_size, hidden_size)

    logits, hidden = gru_model_forward(tokens, params)
    logits = jax.block_until_ready(logits)
    hidden = jax.block_until_ready(hidden)

    ref_logits, ref_hidden = reference_forward(tokens, params)
    # bf16 storage of the gx stream and Wout (f32 accumulation everywhere) -> loose-ish tol.
    assert jnp.allclose(logits, ref_logits, atol=2e-2), "logits mismatch vs reference"
    assert jnp.allclose(hidden, ref_hidden, atol=2e-2), "hidden mismatch vs reference"

    print("KERNEL_OK")
</pallas_src>

<mosaic_0001>
module attributes {stable_mosaic.version = 11 : i64} {
  func.func @kernel(%arg0: i32, %arg1: i32, %arg2: memref<8x16x384xbf16, #tpu.memory_space<vmem>>, %arg3: memref<128x384xf32, #tpu.memory_space<vmem>>, %arg4: memref<1x384xf32, #tpu.memory_space<vmem>>, %arg5: memref<16x128xf32, #tpu.memory_space<vmem>>, %arg6: memref<16x128xf32, #tpu.memory_space<vmem>>) attributes {dimension_semantics = [#tpu.dimension_semantics<parallel>, #tpu.dimension_semantics<arbitrary>], iteration_bounds = array<i64: 1, 1>, scalar_prefetch = 0 : i64, scratch_operands = 1 : i64, tpu.core_type = #tpu.core_type<tc>, window_params = [{transform_indices = @transform_0, window_bounds = array<i64: 8, 16, 384>}, {pipeline_mode = #tpu.pipeline_mode<synchronous>, transform_indices = @transform_1, window_bounds = array<i64: 128, 384>}, {pipeline_mode = #tpu.pipeline_mode<synchronous>, transform_indices = @transform_2, window_bounds = array<i64: 1, 384>}, {transform_indices = @transform_3, window_bounds = array<i64: 16, 128>}]} {
    %c0_i32 = arith.constant 0 : i32
    %0 = arith.cmpi eq, %arg1, %c0_i32 : i32
    %1 = arith.extui %0 : i1 to i32
    %c0_i32_0 = arith.constant 0 : i32
    %2 = arith.cmpi ne, %1, %c0_i32_0 : i32
    scf.if %2 {
      %cst_58 = arith.constant 0.000000e+00 : f32
      %268 = vector.broadcast %cst_58 : f32 to vector<16x128xf32>
      %c0_59 = arith.constant 0 : index
      %c0_60 = arith.constant 0 : index
      %269 = vector.load %arg6[%c0_59, %c0_60] : memref<16x128xf32, #tpu.memory_space<vmem>>, vector<16x128xf32>
      tpu.vector_store %arg6[%c0_59, %c0_60], %268 {strides = array<i32>} : memref<16x128xf32, #tpu.memory_space<vmem>>, vector<16x128xf32>,
    } else {
    }
    %c0 = arith.constant 0 : index
    %c0_1 = arith.constant 0 : index
    %3 = vector.load %arg3[%c0, %c0_1] : memref<128x384xf32, #tpu.memory_space<vmem>>, vector<128x384xf32>
    %c0_2 = arith.constant 0 : index
    %c0_3 = arith.constant 0 : index
    %4 = vector.load %arg4[%c0_2, %c0_3] : memref<1x384xf32, #tpu.memory_space<vmem>>, vector<1x384xf32>
    %5 = vector.shape_cast %4 : vector<1x384xf32> to vector<1x384xf32>
    %6 = vector.broadcast %5 : vector<1x384xf32> to vector<16x384xf32>
    %c0_4 = arith.constant 0 : index
    %c0_5 = arith.constant 0 : index
    %7 = vector.load %arg6[%c0_4, %c0_5] : memref<16x128xf32, #tpu.memory_space<vmem>>, vector<16x128xf32>
    %c0_i32_6 = arith.constant 0 : i32
    %8 = arith.index_cast %c0_i32_6 : i32 to index
    %c0_7 = arith.constant 0 : index
    %c0_8 = arith.constant 0 : index
    %9 = vector.load %arg2[%8, %c0_7, %c0_8] : memref<8x16x384xbf16, #tpu.memory_space<vmem>>, vector<1x16x384xbf16>
    %10 = vector.shape_cast %9 : vector<1x16x384xbf16> to vector<16x384xbf16>
    %11 = arith.extf %10 : vector<16x384xbf16> to vector<16x384xf32>
    %cst = arith.constant dense<0.000000e+00> : vector<16x384xf32>
    %12 = tpu.matmul %7, %3, %cst {dimension_numbers = #tpu.dot_dimension_numbers<[1], [0], [0], [1], [0, 0, 1, 1], [], []>} : vector<16x128xf32>, vector<128x384xf32>, vector<16x384xf32> -> vector<16x384xf32>
    %13 = arith.addf %12, %6 : vector<16x384xf32>
    %14 = vector.extract_strided_slice %11 {offsets = [0, 0], sizes = [16, 128], strides = [1, 1]} : vector<16x384xf32> to vector<16x128xf32>
    %15 = vector.extract_strided_slice %13 {offsets = [0, 0], sizes = [16, 128], strides = [1, 1]} : vector<16x384xf32> to vector<16x128xf32>
    %16 = arith.addf %14, %15 : vector<16x128xf32>
    %17 = arith.negf %16 : vector<16x128xf32>
    %18 = math.exp %17 : vector<16x128xf32>
    %cst_9 = arith.constant 1.000000e+00 : f32
    %19 = vector.broadcast %cst_9 : f32 to vector<16x128xf32>
    %20 = arith.addf %19, %18 : vector<16x128xf32>
    %21 = arith.divf %19, %20 : vector<16x128xf32>
    %22 = vector.extract_strided_slice %11 {offsets = [0, 128], sizes = [16, 128], strides = [1, 1]} : vector<16x384xf32> to vector<16x128xf32>
    %23 = vector.extract_strided_slice %13 {offsets = [0, 128], sizes = [16, 128], strides = [1, 1]} : vector<16x384xf32> to vector<16x128xf32>
    %24 = arith.addf %22, %23 : vector<16x128xf32>
    %25 = arith.negf %24 : vector<16x128xf32>
    %26 = math.exp %25 : vector<16x128xf32>
    %cst_10 = arith.constant 1.000000e+00 : f32
    %27 = vector.broadcast %cst_10 : f32 to vector<16x128xf32>
    %28 = arith.addf %27, %26 : vector<16x128xf32>
    %29 = arith.divf %27, %28 : vector<16x128xf32>
    %30 = vector.extract_strided_slice %11 {offsets = [0, 256], sizes = [16, 128], strides = [1, 1]} : vector<16x384xf32> to vector<16x128xf32>
    %31 = vector.extract_strided_slice %13 {offsets = [0, 256], sizes = [16, 128], strides = [1, 1]} : vector<16x384xf32> to vector<16x128xf32>
    %32 = arith.mulf %21, %31 : vector<16x128xf32>
    %33 = arith.addf %30, %32 : vector<16x128xf32>
    %34 = math.tanh %33 : vector<16x128xf32>
    %cst_11 = arith.constant 1.000000e+00 : f32
    %35 = vector.broadcast %cst_11 : f32 to vector<16x128xf32>
    %36 = arith.subf %35, %29 : vector<16x128xf32>
    %37 = arith.mulf %36, %34 : vector<16x128xf32>
    %38 = arith.mulf %29, %7 : vector<16x128xf32>
    %39 = arith.addf %37, %38 : vector<16x128xf32>
    %c1_i32 = arith.constant 1 : i32
    %40 = arith.index_cast %c1_i32 : i32 to index
    %c0_12 = arith.constant 0 : index
    %c0_13 = arith.constant 0 : index
    %41 = vector.load %arg2[%40, %c0_12, %c0_13] : memref<8x16x384xbf16, #tpu.memory_space<vmem>>, vector<1x16x384xbf16>
    %42 = vector.shape_cast %41 : vector<1x16x384xbf16> to vector<16x384xbf16>
    %43 = arith.extf %42 : vector<16x384xbf16> to vector<16x384xf32>
    %cst_14 = arith.constant dense<0.000000e+00> : vector<16x384xf32>
    %44 = tpu.matmul %39, %3, %cst_14 {dimension_numbers = #tpu.dot_dimension_numbers<[1], [0], [0], [1], [0, 0, 1, 1], [], []>} : vector<16x128xf32>, vector<128x384xf32>, vector<16x384xf32> -> vector<16x384xf32>
    %45 = arith.addf %44, %6 : vector<16x384xf32>
    %46 = vector.extract_strided_slice %43 {offsets = [0, 0], sizes = [16, 128], strides = [1, 1]} : vector<16x384xf32> to vector<16x128xf32>
    %47 = vector.extract_strided_slice %45 {offsets = [0, 0], sizes = [16, 128], strides = [1, 1]} : vector<16x384xf32> to vector<16x128xf32>
    %48 = arith.addf %46, %47 : vector<16x128xf32>
    %49 = arith.negf %48 : vector<16x128xf32>
    %50 = math.exp %49 : vector<16x128xf32>
    %cst_15 = arith.constant 1.000000e+00 : f32
    %51 = vector.broadcast %cst_15 : f32 to vector<16x128xf32>
    %52 = arith.addf %51, %50 : vector<16x128xf32>
    %53 = arith.divf %51, %52 : vector<16x128xf32>
    %54 = vector.extract_strided_slice %43 {offsets = [0, 128], sizes = [16, 128], strides = [1, 1]} : vector<16x384xf32> to vector<16x128xf32>
    %55 = vector.extract_strided_slice %45 {offsets = [0, 128], sizes = [16, 128], strides = [1, 1]} : vector<16x384xf32> to vector<16x128xf32>
    %56 = arith.addf %54, %55 : vector<16x128xf32>
    %57 = arith.negf %56 : vector<16x128xf32>
    %58 = math.exp %57 : vector<16x128xf32>
    %cst_16 = arith.constant 1.000000e+00 : f32
    %59 = vector.broadcast %cst_16 : f32 to vector<16x128xf32>
    %60 = arith.addf %59, %58 : vector<16x128xf32>
    %61 = arith.divf %59, %60 : vector<16x128xf32>
    %62 = vector.extract_strided_slice %43 {offsets = [0, 256], sizes = [16, 128], strides = [1, 1]} : vector<16x384xf32> to vector<16x128xf32>
    %63 = vector.extract_strided_slice %45 {offsets = [0, 256], sizes = [16, 128], strides = [1, 1]} : vector<16x384xf32> to vector<16x128xf32>
    %64 = arith.mulf %53, %63 : vector<16x128xf32>
    %65 = arith.addf %62, %64 : vector<16x128xf32>
    %66 = math.tanh %65 : vector<16x128xf32>
    %cst_17 = arith.constant 1.000000e+00 : f32
    %67 = vector.broadcast %cst_17 : f32 to vector<16x128xf32>
    %68 = arith.subf %67, %61 : vector<16x128xf32>
    %69 = arith.mulf %68, %66 : vector<16x128xf32>
    %70 = arith.mulf %61, %39 : vector<16x128xf32>
    %71 = arith.addf %69, %70 : vector<16x128xf32>
    %c2_i32 = arith.constant 2 : i32
    %72 = arith.index_cast %c2_i32 : i32 to index
    %c0_18 = arith.constant 0 : index
    %c0_19 = arith.constant 0 : index
    %73 = vector.load %arg2[%72, %c0_18, %c0_19] : memref<8x16x384xbf16, #tpu.memory_space<vmem>>, vector<1x16x384xbf16>
    %74 = vector.shape_cast %73 : vector<1x16x384xbf16> to vector<16x384xbf16>
    %75 = arith.extf %74 : vector<16x384xbf16> to vector<16x384xf32>
    %cst_20 = arith.constant dense<0.000000e+00> : vector<16x384xf32>
    %76 = tpu.matmul %71, %3, %cst_20 {dimension_numbers = #tpu.dot_dimension_numbers<[1], [0], [0], [1], [0, 0, 1, 1], [], []>} : vector<16x128xf32>, vector<128x384xf32>, vector<16x384xf32> -> vector<16x384xf32>
    %77 = arith.addf %76, %6 : vector<16x384xf32>
    %78 = vector.extract_strided_slice %75 {offsets = [0, 0], sizes = [16, 128], strides = [1, 1]} : vector<16x384xf32> to vector<16x128xf32>
    %79 = vector.extract_strided_slice %77 {offsets = [0, 0], sizes = [16, 128], strides = [1, 1]} : vector<16x384xf32> to vector<16x128xf32>
    %80 = arith.addf %78, %79 : vector<16x128xf32>
    %81 = arith.negf %80 : vector<16x128xf32>
    %82 = math.exp %81 : vector<16x128xf32>
    %cst_21 = arith.constant 1.000000e+00 : f32
    %83 = vector.broadcast %cst_21 : f32 to vector<16x128xf32>
    %84 = arith.addf %83, %82 : vector<16x128xf32>
    %85 = arith.divf %83, %84 : vector<16x128xf32>
    %86 = vector.extract_strided_slice %75 {offsets = [0, 128], sizes = [16, 128], strides = [1, 1]} : vector<16x384xf32> to vector<16x128xf32>
    %87 = vector.extract_strided_slice %77 {offsets = [0, 128], sizes = [16, 128], strides = [1, 1]} : vector<16x384xf32> to vector<16x128xf32>
    %88 = arith.addf %86, %87 : vector<16x128xf32>
    %89 = arith.negf %88 : vector<16x128xf32>
    %90 = math.exp %89 : vector<16x128xf32>
    %cst_22 = arith.constant 1.000000e+00 : f32
    %91 = vector.broadcast %cst_22 : f32 to vector<16x128xf32>
    %92 = arith.addf %91, %90 : vector<16x128xf32>
    %93 = arith.divf %91, %92 : vector<16x128xf32>
    %94 = vector.extract_strided_slice %75 {offsets = [0, 256], sizes = [16, 128], strides = [1, 1]} : vector<16x384xf32> to vector<16x128xf32>
    %95 = vector.extract_strided_slice %77 {offsets = [0, 256], sizes = [16, 128], strides = [1, 1]} : vector<16x384xf32> to vector<16x128xf32>
    %96 = arith.mulf %85, %95 : vector<16x128xf32>
    %97 = arith.addf %94, %96 : vector<16x128xf32>
    %98 = math.tanh %97 : vector<16x128xf32>
    %cst_23 = arith.constant 1.000000e+00 : f32
    %99 = vector.broadcast %cst_23 : f32 to vector<16x128xf32>
    %100 = arith.subf %99, %93 : vector<16x128xf32>
    %101 = arith.mulf %100, %98 : vector<16x128xf32>
    %102 = arith.mulf %93, %71 : vector<16x128xf32>
    %103 = arith.addf %101, %102 : vector<16x128xf32>
    %c3_i32 = arith.constant 3 : i32
    %104 = arith.index_cast %c3_i32 : i32 to index
    %c0_24 = arith.constant 0 : index
    %c0_25 = arith.constant 0 : index
    %105 = vector.load %arg2[%104, %c0_24, %c0_25] : memref<8x16x384xbf16, #tpu.memory_space<vmem>>, vector<1x16x384xbf16>
    %106 = vector.shape_cast %105 : vector<1x16x384xbf16> to vector<16x384xbf16>
    %107 = arith.extf %106 : vector<16x384xbf16> to vector<16x384xf32>
    %cst_26 = arith.constant dense<0.000000e+00> : vector<16x384xf32>
    %108 = tpu.matmul %103, %3, %cst_26 {dimension_numbers = #tpu.dot_dimension_numbers<[1], [0], [0], [1], [0, 0, 1, 1], [], []>} : vector<16x128xf32>, vector<128x384xf32>, vector<16x384xf32> -> vector<16x384xf32>
    %109 = arith.addf %108, %6 : vector<16x384xf32>
    %110 = vector.extract_strided_slice %107 {offsets = [0, 0], sizes = [16, 128], strides = [1, 1]} : vector<16x384xf32> to vector<16x128xf32>
    %111 = vector.extract_strided_slice %109 {offsets = [0, 0], sizes = [16, 128], strides = [1, 1]} : vector<16x384xf32> to vector<16x128xf32>
    %112 = arith.addf %110, %111 : vector<16x128xf32>
    %113 = arith.negf %112 : vector<16x128xf32>
    %114 = math.exp %113 : vector<16x128xf32>
    %cst_27 = arith.constant 1.000000e+00 : f32
    %115 = vector.broadcast %cst_27 : f32 to vector<16x128xf32>
    %116 = arith.addf %115, %114 : vector<16x128xf32>
    %117 = arith.divf %115, %116 : vector<16x128xf32>
    %118 = vector.extract_strided_slice %107 {offsets = [0, 128], sizes = [16, 128], strides = [1, 1]} : vector<16x384xf32> to vector<16x128xf32>
    %119 = vector.extract_strided_slice %109 {offsets = [0, 128], sizes = [16, 128], strides = [1, 1]} : vector<16x384xf32> to vector<16x128xf32>
    %120 = arith.addf %118, %119 : vector<16x128xf32>
    %121 = arith.negf %120 : vector<16x128xf32>
    %122 = math.exp %121 : vector<16x128xf32>
    %cst_28 = arith.constant 1.000000e+00 : f32
    %123 = vector.broadcast %cst_28 : f32 to vector<16x128xf32>
    %124 = arith.addf %123, %122 : vector<16x128xf32>
    %125 = arith.divf %123, %124 : vector<16x128xf32>
    %126 = vector.extract_strided_slice %107 {offsets = [0, 256], sizes = [16, 128], strides = [1, 1]} : vector<16x384xf32> to vector<16x128xf32>
    %127 = vector.extract_strided_slice %109 {offsets = [0, 256], sizes = [16, 128], strides = [1, 1]} : vector<16x384xf32> to vector<16x128xf32>
    %128 = arith.mulf %117, %127 : vector<16x128xf32>
    %129 = arith.addf %126, %128 : vector<16x128xf32>
    %130 = math.tanh %129 : vector<16x128xf32>
    %cst_29 = arith.constant 1.000000e+00 : f32
    %131 = vector.broadcast %cst_29 : f32 to vector<16x128xf32>
    %132 = arith.subf %131, %125 : vector<16x128xf32>
    %133 = arith.mulf %132, %130 : vector<16x128xf32>
    %134 = arith.mulf %125, %103 : vector<16x128xf32>
    %135 = arith.addf %133, %134 : vector<16x128xf32>
    %c4_i32 = arith.constant 4 : i32
    %136 = arith.index_cast %c4_i32 : i32 to index
    %c0_30 = arith.constant 0 : index
    %c0_31 = arith.constant 0 : index
    %137 = vector.load %arg2[%136, %c0_30, %c0_31] : memref<8x16x384xbf16, #tpu.memory_space<vmem>>, vector<1x16x384xbf16>
    %138 = vector.shape_cast %137 : vector<1x16x384xbf16> to vector<16x384xbf16>
    %139 = arith.extf %138 : vector<16x384xbf16> to vector<16x384xf32>
    %cst_32 = arith.constant dense<0.000000e+00> : vector<16x384xf32>
    %140 = tpu.matmul %135, %3, %cst_32 {dimension_numbers = #tpu.dot_dimension_numbers<[1], [0], [0], [1], [0, 0, 1, 1], [], []>} : vector<16x128xf32>, vector<128x384xf32>, vector<16x384xf32> -> vector<16x384xf32>
    %141 = arith.addf %140, %6 : vector<16x384xf32>
    %142 = vector.extract_strided_slice %139 {offsets = [0, 0], sizes = [16, 128], strides = [1, 1]} : vector<16x384xf32> to vector<16x128xf32>
    %143 = vector.extract_strided_slice %141 {offsets = [0, 0], sizes = [16, 128], strides = [1, 1]} : vector<16x384xf32> to vector<16x128xf32>
    %144 = arith.addf %142, %143 : vector<16x128xf32>
    %145 = arith.negf %144 : vector<16x128xf32>
    %146 = math.exp %145 : vector<16x128xf32>
    %cst_33 = arith.constant 1.000000e+00 : f32
    %147 = vector.broadcast %cst_33 : f32 to vector<16x128xf32>
    %148 = arith.addf %147, %146 : vector<16x128xf32>
    %149 = arith.divf %147, %148 : vector<16x128xf32>
    %150 = vector.extract_strided_slice %139 {offsets = [0, 128], sizes = [16, 128], strides = [1, 1]} : vector<16x384xf32> to vector<16x128xf32>
    %151 = vector.extract_strided_slice %141 {offsets = [0, 128], sizes = [16, 128], strides = [1, 1]} : vector<16x384xf32> to vector<16x128xf32>
    %152 = arith.addf %150, %151 : vector<16x128xf32>
    %153 = arith.negf %152 : vector<16x128xf32>
    %154 = math.exp %153 : vector<16x128xf32>
    %cst_34 = arith.constant 1.000000e+00 : f32
    %155 = vector.broadcast %cst_34 : f32 to vector<16x128xf32>
    %156 = arith.addf %155, %154 : vector<16x128xf32>
    %157 = arith.divf %155, %156 : vector<16x128xf32>
    %158 = vector.extract_strided_slice %139 {offsets = [0, 256], sizes = [16, 128], strides = [1, 1]} : vector<16x384xf32> to vector<16x128xf32>
    %159 = vector.extract_strided_slice %141 {offsets = [0, 256], sizes = [16, 128], strides = [1, 1]} : vector<16x384xf32> to vector<16x128xf32>
    %160 = arith.mulf %149, %159 : vector<16x128xf32>
    %161 = arith.addf %158, %160 : vector<16x128xf32>
    %162 = math.tanh %161 : vector<16x128xf32>
    %cst_35 = arith.constant 1.000000e+00 : f32
    %163 = vector.broadcast %cst_35 : f32 to vector<16x128xf32>
    %164 = arith.subf %163, %157 : vector<16x128xf32>
    %165 = arith.mulf %164, %162 : vector<16x128xf32>
    %166 = arith.mulf %157, %135 : vector<16x128xf32>
    %167 = arith.addf %165, %166 : vector<16x128xf32>
    %c5_i32 = arith.constant 5 : i32
    %168 = arith.index_cast %c5_i32 : i32 to index
    %c0_36 = arith.constant 0 : index
    %c0_37 = arith.constant 0 : index
    %169 = vector.load %arg2[%168, %c0_36, %c0_37] : memref<8x16x384xbf16, #tpu.memory_space<vmem>>, vector<1x16x384xbf16>
    %170 = vector.shape_cast %169 : vector<1x16x384xbf16> to vector<16x384xbf16>
    %171 = arith.extf %170 : vector<16x384xbf16> to vector<16x384xf32>
    %cst_38 = arith.constant dense<0.000000e+00> : vector<16x384xf32>
    %172 = tpu.matmul %167, %3, %cst_38 {dimension_numbers = #tpu.dot_dimension_numbers<[1], [0], [0], [1], [0, 0, 1, 1], [], []>} : vector<16x128xf32>, vector<128x384xf32>, vector<16x384xf32> -> vector<16x384xf32>
    %173 = arith.addf %172, %6 : vector<16x384xf32>
    %174 = vector.extract_strided_slice %171 {offsets = [0, 0], sizes = [16, 128], strides = [1, 1]} : vector<16x384xf32> to vector<16x128xf32>
    %175 = vector.extract_strided_slice %173 {offsets = [0, 0], sizes = [16, 128], strides = [1, 1]} : vector<16x384xf32> to vector<16x128xf32>
    %176 = arith.addf %174, %175 : vector<16x128xf32>
    %177 = arith.negf %176 : vector<16x128xf32>
    %178 = math.exp %177 : vector<16x128xf32>
    %cst_39 = arith.constant 1.000000e+00 : f32
    %179 = vector.broadcast %cst_39 : f32 to vector<16x128xf32>
    %180 = arith.addf %179, %178 : vector<16x128xf32>
    %181 = arith.divf %179, %180 : vector<16x128xf32>
    %182 = vector.extract_strided_slice %171 {offsets = [0, 128], sizes = [16, 128], strides = [1, 1]} : vector<16x384xf32> to vector<16x128xf32>
    %183 = vector.extract_strided_slice %173 {offsets = [0, 128], sizes = [16, 128], strides = [1, 1]} : vector<16x384xf32> to vector<16x128xf32>
    %184 = arith.addf %182, %183 : vector<16x128xf32>
    %185 = arith.negf %184 : vector<16x128xf32>
    %186 = math.exp %185 : vector<16x128xf32>
    %cst_40 = arith.constant 1.000000e+00 : f32
    %187 = vector.broadcast %cst_40 : f32 to vector<16x128xf32>
    %188 = arith.addf %187, %186 : vector<16x128xf32>
    %189 = arith.divf %187, %188 : vector<16x128xf32>
    %190 = vector.extract_strided_slice %171 {offsets = [0, 256], sizes = [16, 128], strides = [1, 1]} : vector<16x384xf32> to vector<16x128xf32>
    %191 = vector.extract_strided_slice %173 {offsets = [0, 256], sizes = [16, 128], strides = [1, 1]} : vector<16x384xf32> to vector<16x128xf32>
    %192 = arith.mulf %181, %191 : vector<16x128xf32>
    %193 = arith.addf %190, %192 : vector<16x128xf32>
    %194 = math.tanh %193 : vector<16x128xf32>
    %cst_41 = arith.constant 1.000000e+00 : f32
    %195 = vector.broadcast %cst_41 : f32 to vector<16x128xf32>
    %196 = arith.subf %195, %189 : vector<16x128xf32>
    %197 = arith.mulf %196, %194 : vector<16x128xf32>
    %198 = arith.mulf %189, %167 : vector<16x128xf32>
    %199 = arith.addf %197, %198 : vector<16x128xf32>
    %c6_i32 = arith.constant 6 : i32
    %200 = arith.index_cast %c6_i32 : i32 to index
    %c0_42 = arith.constant 0 : index
    %c0_43 = arith.constant 0 : index
    %201 = vector.load %arg2[%200, %c0_42, %c0_43] : memref<8x16x384xbf16, #tpu.memory_space<vmem>>, vector<1x16x384xbf16>
    %202 = vector.shape_cast %201 : vector<1x16x384xbf16> to vector<16x384xbf16>
    %203 = arith.extf %202 : vector<16x384xbf16> to vector<16x384xf32>
    %cst_44 = arith.constant dense<0.000000e+00> : vector<16x384xf32>
    %204 = tpu.matmul %199, %3, %cst_44 {dimension_numbers = #tpu.dot_dimension_numbers<[1], [0], [0], [1], [0, 0, 1, 1], [], []>} : vector<16x128xf32>, vector<128x384xf32>, vector<16x384xf32> -> vector<16x384xf32>
    %205 = arith.addf %204, %6 : vector<16x384xf32>
    %206 = vector.extract_strided_slice %203 {offsets = [0, 0], sizes = [16, 128], strides = [1, 1]} : vector<16x384xf32> to vector<16x128xf32>
    %207 = vector.extract_strided_slice %205 {offsets = [0, 0], sizes = [16, 128], strides = [1, 1]} : vector<16x384xf32> to vector<16x128xf32>
    %208 = arith.addf %206, %207 : vector<16x128xf32>
    %209 = arith.negf %208 : vector<16x128xf32>
    %210 = math.exp %209 : vector<16x128xf32>
    %cst_45 = arith.constant 1.000000e+00 : f32
    %211 = vector.broadcast %cst_45 : f32 to vector<16x128xf32>
    %212 = arith.addf %211, %210 : vector<16x128xf32>
    %213 = arith.divf %211, %212 : vector<16x128xf32>
    %214 = vector.extract_strided_slice %203 {offsets = [0, 128], sizes = [16, 128], strides = [1, 1]} : vector<16x384xf32> to vector<16x128xf32>
    %215 = vector.extract_strided_slice %205 {offsets = [0, 128], sizes = [16, 128], strides = [1, 1]} : vector<16x384xf32> to vector<16x128xf32>
    %216 = arith.addf %214, %215 : vector<16x128xf32>
    %217 = arith.negf %216 : vector<16x128xf32>
    %218 = math.exp %217 : vector<16x128xf32>
    %cst_46 = arith.constant 1.000000e+00 : f32
    %219 = vector.broadcast %cst_46 : f32 to vector<16x128xf32>
    %220 = arith.addf %219, %218 : vector<16x128xf32>
    %221 = arith.divf %219, %220 : vector<16x128xf32>
    %222 = vector.extract_strided_slice %203 {offsets = [0, 256], sizes = [16, 128], strides = [1, 1]} : vector<16x384xf32> to vector<16x128xf32>
    %223 = vector.extract_strided_slice %205 {offsets = [0, 256], sizes = [16, 128], strides = [1, 1]} : vector<16x384xf32> to vector<16x128xf32>
    %224 = arith.mulf %213, %223 : vector<16x128xf32>
    %225 = arith.addf %222, %224 : vector<16x128xf32>
    %226 = math.tanh %225 : vector<16x128xf32>
    %cst_47 = arith.constant 1.000000e+00 : f32
    %227 = vector.broadcast %cst_47 : f32 to vector<16x128xf32>
    %228 = arith.subf %227, %221 : vector<16x128xf32>
    %229 = arith.mulf %228, %226 : vector<16x128xf32>
    %230 = arith.mulf %221, %199 : vector<16x128xf32>
    %231 = arith.addf %229, %230 : vector<16x128xf32>
    %c7_i32 = arith.constant 7 : i32
    %232 = arith.index_cast %c7_i32 : i32 to index
    %c0_48 = arith.constant 0 : index
    %c0_49 = arith.constant 0 : index
    %233 = vector.load %arg2[%232, %c0_48, %c0_49] : memref<8x16x384xbf16, #tpu.memory_space<vmem>>, vector<1x16x384xbf16>
    %234 = vector.shape_cast %233 : vector<1x16x384xbf16> to vector<16x384xbf16>
    %235 = arith.extf %234 : vector<16x384xbf16> to vector<16x384xf32>
    %cst_50 = arith.constant dense<0.000000e+00> : vector<16x384xf32>
    %236 = tpu.matmul %231, %3, %cst_50 {dimension_numbers = #tpu.dot_dimension_numbers<[1], [0], [0], [1], [0, 0, 1, 1], [], []>} : vector<16x128xf32>, vector<128x384xf32>, vector<16x384xf32> -> vector<16x384xf32>
    %237 = arith.addf %236, %6 : vector<16x384xf32>
    %238 = vector.extract_strided_slice %235 {offsets = [0, 0], sizes = [16, 128], strides = [1, 1]} : vector<16x384xf32> to vector<16x128xf32>
    %239 = vector.extract_strided_slice %237 {offsets = [0, 0], sizes = [16, 128], strides = [1, 1]} : vector<16x384xf32> to vector<16x128xf32>
    %240 = arith.addf %238, %239 : vector<16x128xf32>
    %241 = arith.negf %240 : vector<16x128xf32>
    %242 = math.exp %241 : vector<16x128xf32>
    %cst_51 = arith.constant 1.000000e+00 : f32
    %243 = vector.broadcast %cst_51 : f32 to vector<16x128xf32>
    %244 = arith.addf %243, %242 : vector<16x128xf32>
    %245 = arith.divf %243, %244 : vector<16x128xf32>
    %246 = vector.extract_strided_slice %235 {offsets = [0, 128], sizes = [16, 128], strides = [1, 1]} : vector<16x384xf32> to vector<16x128xf32>
    %247 = vector.extract_strided_slice %237 {offsets = [0, 128], sizes = [16, 128], strides = [1, 1]} : vector<16x384xf32> to vector<16x128xf32>
    %248 = arith.addf %246, %247 : vector<16x128xf32>
    %249 = arith.negf %248 : vector<16x128xf32>
    %250 = math.exp %249 : vector<16x128xf32>
    %cst_52 = arith.constant 1.000000e+00 : f32
    %251 = vector.broadcast %cst_52 : f32 to vector<16x128xf32>
    %252 = arith.addf %251, %250 : vector<16x128xf32>
    %253 = arith.divf %251, %252 : vector<16x128xf32>
    %254 = vector.extract_strided_slice %235 {offsets = [0, 256], sizes = [16, 128], strides = [1, 1]} : vector<16x384xf32> to vector<16x128xf32>
    %255 = vector.extract_strided_slice %237 {offsets = [0, 256], sizes = [16, 128], strides = [1, 1]} : vector<16x384xf32> to vector<16x128xf32>
    %256 = arith.mulf %245, %255 : vector<16x128xf32>
    %257 = arith.addf %254, %256 : vector<16x128xf32>
    %258 = math.tanh %257 : vector<16x128xf32>
    %cst_53 = arith.constant 1.000000e+00 : f32
    %259 = vector.broadcast %cst_53 : f32 to vector<16x128xf32>
    %260 = arith.subf %259, %253 : vector<16x128xf32>
    %261 = arith.mulf %260, %258 : vector<16x128xf32>
    %262 = arith.mulf %253, %231 : vector<16x128xf32>
    %263 = arith.addf %261, %262 : vector<16x128xf32>
    %c8_i32 = arith.constant 8 : i32
    %c0_54 = arith.constant 0 : index
    %c0_55 = arith.constant 0 : index
    %264 = vector.load %arg6[%c0_54, %c0_55] : memref<16x128xf32, #tpu.memory_space<vmem>>, vector<16x128xf32>
    tpu.vector_store %arg6[%c0_54, %c0_55], %263 {strides = array<i32>} : memref<16x128xf32, #tpu.memory_space<vmem>>, vector<16x128xf32>,
    %c0_i32_56 = arith.constant 0 : i32
    %265 = arith.cmpi eq, %arg1, %c0_i32_56 : i32
    %266 = arith.extui %265 : i1 to i32
    %c0_i32_57 = arith.constant 0 : i32
    %267 = arith.cmpi ne, %266, %c0_i32_57 : i32
    scf.if %267 {
      %c0_58 = arith.constant 0 : index
      %c0_59 = arith.constant 0 : index
      %268 = vector.load %arg5[%c0_58, %c0_59] : memref<16x128xf32, #tpu.memory_space<vmem>>, vector<16x128xf32>
      tpu.vector_store %arg5[%c0_58, %c0_59], %263 {strides = array<i32>} : memref<16x128xf32, #tpu.memory_space<vmem>>, vector<16x128xf32>,
    } else {
    }
    return
  }
  func.func @transform_0(%arg0: i32, %arg1: i32) -> (i32, i32, i32) {
    %c0_i32 = arith.constant 0 : i32
    %c0_i32_0 = arith.constant 0 : i32
    return %arg1, %arg0, %c0_i32 : i32, i32, i32
  }
  func.func @transform_1(%arg0: i32, %arg1: i32) -> (i32, i32) {
    %c0_i32 = arith.constant 0 : i32
    %c0_i32_0 = arith.constant 0 : i32
    %c0_i32_1 = arith.constant 0 : i32
    return %c0_i32, %c0_i32_0 : i32, i32
  }
  func.func @transform_2(%arg0: i32, %arg1: i32) -> (i32, i32) {
    %c0_i32 = arith.constant 0 : i32
    %c0_i32_0 = arith.constant 0 : i32
    %c0_i32_1 = arith.constant 0 : i32
    return %c0_i32, %c0_i32_0 : i32, i32
  }
  func.func @transform_3(%arg0: i32, %arg1: i32) -> (i32, i32) {
    %c0_i32 = arith.constant 0 : i32
    %c0_i32_0 = arith.constant 0 : i32
    return %arg0, %c0_i32 : i32, i32
  }
}

module attributes {stable_mosaic.version = 11 : i64} {
  func.func @_proj_kernel(%arg0: i32, %arg1: memref<16x128xf32, #tpu.memory_space<vmem>>, %arg2: memref<128x128xbf16, #tpu.memory_space<vmem>>, %arg3: memref<1x128xf32, #tpu.memory_space<vmem>>, %arg4: memref<16x128xf32, #tpu.memory_space<vmem>>) attributes {dimension_semantics = [#tpu.dimension_semantics<parallel>], iteration_bounds = array<i64: 1>, scalar_prefetch = 0 : i64, scratch_operands = 0 : i64, tpu.core_type = #tpu.core_type<tc>, window_params = [{pipeline_mode = #tpu.pipeline_mode<synchronous>, transform_indices = @transform_0, window_bounds = array<i64: 16, 128>}, {transform_indices = @transform_1, window_bounds = array<i64: 128, 128>}, {transform_indices = @transform_2, window_bounds = array<i64: 1, 128>}, {transform_indices = @transform_3, window_bounds = array<i64: 16, 128>}]} {
    %c0 = arith.constant 0 : index
    %c0_0 = arith.constant 0 : index
    %0 = vector.load %arg1[%c0, %c0_0] : memref<16x128xf32, #tpu.memory_space<vmem>>, vector<16x128xf32>
    %c0_1 = arith.constant 0 : index
    %c0_2 = arith.constant 0 : index
    %1 = vector.load %arg2[%c0_1, %c0_2] : memref<128x128xbf16, #tpu.memory_space<vmem>>, vector<128x128xbf16>
    %2 = arith.extf %1 : vector<128x128xbf16> to vector<128x128xf32>
    %cst = arith.constant dense<0.000000e+00> : vector<16x128xf32>
    %3 = tpu.matmul %0, %2, %cst {dimension_numbers = #tpu.dot_dimension_numbers<[1], [0], [0], [1], [0, 0, 1, 1], [], []>} : vector<16x128xf32>, vector<128x128xf32>, vector<16x128xf32> -> vector<16x128xf32>
    %c0_3 = arith.constant 0 : index
    %c0_4 = arith.constant 0 : index
    %4 = vector.load %arg3[%c0_3, %c0_4] : memref<1x128xf32, #tpu.memory_space<vmem>>, vector<1x128xf32>
    %5 = vector.broadcast %4 : vector<1x128xf32> to vector<16x128xf32>
    %6 = arith.addf %3, %5 : vector<16x128xf32>
    %c0_5 = arith.constant 0 : index
    %c0_6 = arith.constant 0 : index
    %7 = vector.load %arg4[%c0_5, %c0_6] : memref<16x128xf32, #tpu.memory_space<vmem>>, vector<16x128xf32>
    tpu.vector_store %arg4[%c0_5, %c0_6], %6 {strides = array<i32>} : memref<16x128xf32, #tpu.memory_space<vmem>>, vector<16x128xf32>,
    return
  }
  func.func @transform_0(%arg0: i32) -> (i32, i32) {
    %c0_i32 = arith.constant 0 : i32
    %c0_i32_0 = arith.constant 0 : i32
    %c0_i32_1 = arith.constant 0 : i32
    return %c0_i32, %c0_i32_0 : i32, i32
  }
  func.func @transform_1(%arg0: i32) -> (i32, i32) {
    %c0_i32 = arith.constant 0 : i32
    %c0_i32_0 = arith.constant 0 : i32
    return %c0_i32, %arg0 : i32, i32
  }
  func.func @transform_2(%arg0: i32) -> (i32, i32) {
    %c0_i32 = arith.constant 0 : i32
    %c0_i32_0 = arith.constant 0 : i32
    return %c0_i32, %arg0 : i32, i32
  }
  func.func @transform_3(%arg0: i32) -> (i32, i32) {
    %c0_i32 = arith.constant 0 : i32
    %c0_i32_0 = arith.constant 0 : i32
    return %c0_i32, %arg0 : i32, i32
  }
}

</mosaic_0001>

<llo_original>
// kernel: gru_model_forward.3
$region0: #{gru_model_forward.3}
  #allocation0 [shape = 'u32[]', space=smem, size = 0x4, offset = 0x4, fixed_abs, tag = 'smem constant byte address 0x4 - core index']
  #allocation1 [shape = 'u32[144,128]{1,0:T(1,128)}', space=vmem, size = 0x12000, scoped, tag = 'internal scratch']
  %s0 = inlined_call_operand.vmem [shape: f32[16,128], index: 0, kind: input, shape index: {}]
  %s1 = inlined_call_operand.vmem [shape: bf16[128,128], index: 1, kind: input, shape index: {}]
  %s2 = inlined_call_operand.vmem [shape: f32[1,128], index: 2, kind: input, shape index: {}]
  %s3 = inlined_call_operand.vmem [shape: f32[16,128], index: 3, kind: output, shape index: {}]
  %s4 = sld [smem:[#allocation0]]
  $region22: #{gru_model_forward.3} parent=0
    _
  %s6 = ssub.s32 1, %s4
  %s7 = scalar_select 0, %s6, %s4
  // Predicated region
  $region2: #{gru_model_forward.3} parent=0 // pred_check
    _
  $region3: #{gru_model_forward.3} parent=0 // pred_check_branch
    %9 = sbr.rel (0) target = $region5
  $region4: #{gru_model_forward.3} parent=0 // pred_region
    _
  $region5: #{gru_model_forward.3} parent=0 // pred_fallthru
    _
  // Predicated region
  $region6: #{gru_model_forward.3} parent=0 // pred_check
    _
  $region7: #{gru_model_forward.3} parent=0 // pred_check_branch
    %11 = sbr.rel (0) target = $region9
  $region8: #{gru_model_forward.3} parent=0 // pred_region
    _
  $region9: #{gru_model_forward.3} parent=0 // pred_fallthru
    _
  // Predicated region
  $region10: #{gru_model_forward.3} parent=0 // pred_check
    _
  $region11: #{gru_model_forward.3} parent=0 // pred_check_branch
    %13 = sbr.rel (0) target = $region13
  $region12: #{gru_model_forward.3} parent=0 // pred_region
    _
  $region13: #{gru_model_forward.3} parent=0 // pred_fallthru
    _
  %v14 = vld [vmem:[%s0] sm:$0xff]
  %v15 = vld [vmem:[%s0 + $0x8] sm:$0xff]
  %v16 = vld [vmem:[%s1] sm:$0xf]
  %v17 = vld [vmem:[%s1 + $0x4] sm:$0xf]
  %v18 = vld [vmem:[%s1 + $0x8] sm:$0xf]
  %v19 = vld [vmem:[%s1 + $0xc] sm:$0xf]
  %v20 = vld [vmem:[%s1 + $0x10] sm:$0xf]
  %v21 = vld [vmem:[%s1 + $0x14] sm:$0xf]
  %v22 = vld [vmem:[%s1 + $0x18] sm:$0xf]
  %v23 = vld [vmem:[%s1 + $0x1c] sm:$0xf]
  %v24 = vld [vmem:[%s1 + $0x20] sm:$0xf]
  %v25 = vld [vmem:[%s1 + $0x24] sm:$0xf]
  %v26 = vld [vmem:[%s1 + $0x28] sm:$0xf]
  %v27 = vld [vmem:[%s1 + $0x2c] sm:$0xf]
  %v28 = vld [vmem:[%s1 + $0x30] sm:$0xf]
  %v29 = vld [vmem:[%s1 + $0x34] sm:$0xf]
  %v30 = vld [vmem:[%s1 + $0x38] sm:$0xf]
  %v31 = vld [vmem:[%s1 + $0x3c] sm:$0xf]
  %v32 = vunpack.c.l.bf16 %v16
  %v33 = vunpack.c.l.bf16 %v17
  %v34 = vunpack.c.l.bf16 %v18
  %v35 = vunpack.c.l.bf16 %v19
  %v36 = vunpack.c.l.bf16 %v20
  %v37 = vunpack.c.l.bf16 %v21
  %v38 = vunpack.c.l.bf16 %v22
  %v39 = vunpack.c.l.bf16 %v23
  %v40 = vunpack.c.l.bf16 %v24
  %v41 = vunpack.c.l.bf16 %v25
  %v42 = vunpack.c.l.bf16 %v26
  %v43 = vunpack.c.l.bf16 %v27
  %v44 = vunpack.c.l.bf16 %v28
  %v45 = vunpack.c.l.bf16 %v29
  %v46 = vunpack.c.l.bf16 %v30
  %v47 = vunpack.c.l.bf16 %v31
  %v48 = vld [vmem:[%s2] sm:$0x1]
  %v50 = vlaneseq
  %v51 = vshrl.u32 %v50, 7
  %v52 = vsub.s32 0, %v51
  %v53 = vrot.slane %v48, %v52
  %55 = vmatprep.subr.mxu0 0.0
  %56 = vmatpush1.msra.mxu0 %v32
  %57 = vmatprep.subr.mxu0 0.0
  %58 = vmatpush1.msra.mxu0 %v33
  %59 = vmatprep.subr.mxu0 0.0
  %60 = vmatpush1.msra.mxu0 %v34
  %61 = vmatprep.subr.mxu0 0.0
  %62 = vmatpush1.msra.mxu0 %v35
  %63 = vmatprep.subr.mxu0 0.0
  %64 = vmatpush1.msra.mxu0 %v36
  %65 = vmatprep.subr.mxu0 0.0
  %66 = vmatpush1.msra.mxu0 %v37
  %67 = vmatprep.subr.mxu0 0.0
  %68 = vmatpush1.msra.mxu0 %v38
  %69 = vmatprep.subr.mxu0 0.0
  %70 = vmatpush1.msra.mxu0 %v39
  %71 = vmatprep.subr.mxu0 0.0
  %72 = vmatpush1.msra.mxu0 %v40
  %73 = vmatprep.subr.mxu0 0.0
  %74 = vmatpush1.msra.mxu0 %v41
  %75 = vmatprep.subr.mxu0 0.0
  %76 = vmatpush1.msra.mxu0 %v42
  %77 = vmatprep.subr.mxu0 0.0
  %78 = vmatpush1.msra.mxu0 %v43
  %79 = vmatprep.subr.mxu0 0.0
  %80 = vmatpush1.msra.mxu0 %v44
  %81 = vmatprep.subr.mxu0 0.0
  %82 = vmatpush1.msra.mxu0 %v45
  %83 = vmatprep.subr.mxu0 0.0
  %84 = vmatpush1.msra.mxu0 %v46
  %85 = vmatprep.subr.mxu0 0.0
  %86 = vmatpush1.msra.mxu0 %v47
  %87 = vmatprep.subr.mxu0 0.0
  %88 = vmatpush1.msra.mxu0 0.0
  %89 = vmatprep.subr.mxu0 0.0
  %90 = vmatpush1.msra.mxu0 0.0
  %91 = vmatprep.subr.mxu0 0.0
  %92 = vmatpush1.msra.mxu0 0.0
  %93 = vmatprep.subr.mxu0 0.0
  %94 = vmatpush1.msra.mxu0 0.0
  %95 = vmatprep.subr.mxu0 0.0
  %96 = vmatpush1.msra.mxu0 0.0
  %97 = vmatprep.subr.mxu0 0.0
  %98 = vmatpush1.msra.mxu0 0.0
  %99 = vmatprep.subr.mxu0 0.0
  %100 = vmatpush1.msra.mxu0 0.0
  %101 = vmatprep.subr.mxu0 0.0
  %102 = vmatpush1.msra.mxu0 0.0
  %103 = vmatprep.subr.mxu0 0.0
  %104 = vmatpush1.msra.mxu0 0.0
  %105 = vmatprep.subr.mxu0 0.0
  %106 = vmatpush1.msra.mxu0 0.0
  %107 = vmatprep.subr.mxu0 0.0
  %108 = vmatpush1.msra.mxu0 0.0
  %109 = vmatprep.subr.mxu0 0.0
  %110 = vmatpush1.msra.mxu0 0.0
  %111 = vmatprep.subr.mxu0 0.0
  %112 = vmatpush1.msra.mxu0 0.0
  %113 = vmatprep.subr.mxu0 0.0
  %114 = vmatpush1.msra.mxu0 0.0
  %115 = vmatprep.subr.mxu0 0.0
  %116 = vmatpush1.msra.mxu0 0.0
  %117 = vmatprep.subr.mxu0 0.0
  %118 = vmatpush1.msra.mxu0 0.0
  %119 = vmatprep.mubr.f32.mxu0 0.0
  %120 = vmatmul.mubr.f32.gmra.mrb[0].mxu0 %v14
  %v121 = vpop.f32.mrb[0].mxu0
  %v122 = vadd.f32 %v53, %v121
  %v123 = vpop.f32.mrb[0].mxu0
  %124 = vmatprep.mubr.f32.mxu0 0.0
  %125 = vmatmul.mubr.f32.gmra.mrb[0].mxu0 %v15
  %v126 = vpop.f32.mrb[0].mxu0
  %v127 = vadd.f32 %v53, %v126
  %v128 = vpop.f32.mrb[0].mxu0
  %129 = vdwg.mxu0
  %130 = vst [vmem:[%s3] sm:$0xff] %v122
  %131 = vst [vmem:[%s3 + $0x8] sm:$0xff] %v127
  // Predicated region
  $region14: #{gru_model_forward.3} parent=0 // pred_check
    _
  $region15: #{gru_model_forward.3} parent=0 // pred_check_branch
    %133 = sbr.rel (0) target = $region17
  $region16: #{gru_model_forward.3} parent=0 // pred_region
    _
  $region17: #{gru_model_forward.3} parent=0 // pred_fallthru
    _
  // Predicated region
  $region18: #{gru_model_forward.3} parent=0 // pred_check
    _
  $region19: #{gru_model_forward.3} parent=0 // pred_check_branch
    %135 = sbr.rel (0) target = $region21
  $region20: #{gru_model_forward.3} parent=0 // pred_region
    _
  $region21: #{gru_model_forward.3} parent=0 // pred_fallthru
    _

// kernel: gru_model_forward.2
$region0: #{gru_model_forward.2}
  #allocation0 [shape = 'u32[]', space=smem, size = 0x4, offset = 0x4, fixed_abs, tag = 'smem constant byte address 0x4 - core index']
  #allocation1 [shape = 'u32[144,128]{1,0:T(1,128)}', space=vmem, size = 0x12000, scoped, tag = 'internal scratch']
  #allocation2 [shape = 'f32[16,128]{1,0:T(8,128)}', space=vmem, size = 0x2000, scoped, tag = 'scratch operand']
  %s0 = inlined_call_operand.vmem [shape: bf16[8,16,384], index: 0, kind: input, shape index: {}]
  %s1 = inlined_call_operand.vmem [shape: f32[128,384], index: 1, kind: input, shape index: {}]
  %s2 = inlined_call_operand.vmem [shape: f32[1,384], index: 2, kind: input, shape index: {}]
  %s3 = inlined_call_operand.vmem [shape: f32[16,128], index: 3, kind: output, shape index: {}]
  %s4 = sld [smem:[#allocation0]]
  $region30: #{gru_model_forward.2} parent=0
    _
  %s6 = ssub.s32 1, %s4
  %s7 = scalar_select 0, %s6, %s4
  // Predicated region
  $region2: #{gru_model_forward.2} parent=0 // pred_check
    _
  $region3: #{gru_model_forward.2} parent=0 // pred_check_branch
    %9 = sbr.rel (0) target = $region5
  $region4: #{gru_model_forward.2} parent=0 // pred_region
    _
  $region5: #{gru_model_forward.2} parent=0 // pred_fallthru
    _
  // Predicated region
  $region6: #{gru_model_forward.2} parent=0 // pred_check
    _
  $region7: #{gru_model_forward.2} parent=0 // pred_check_branch
    %11 = sbr.rel (0) target = $region9
  $region8: #{gru_model_forward.2} parent=0 // pred_region
    _
  $region9: #{gru_model_forward.2} parent=0 // pred_fallthru
    _
  // Predicated region
  $region10: #{gru_model_forward.2} parent=0 // pred_check
    _
  $region11: #{gru_model_forward.2} parent=0 // pred_check_branch
    %13 = sbr.rel (0) target = $region13
  $region12: #{gru_model_forward.2} parent=0 // pred_region
    _
  $region13: #{gru_model_forward.2} parent=0 // pred_fallthru
    _
  %p14 = scmp.eq.s32.totalorder 0, 0
  // Predicated region
  $region14: #{gru_model_forward.2} parent=0 // pred_check
    %p15 = pneg %p14
  $region15: #{gru_model_forward.2} parent=0 // pred_check_branch
    %17 = sbr.rel (%p15) target = $region17
  $region16: #{gru_model_forward.2} parent=0 // pred_region
    %18 = vst [vmem:[#allocation2] sm:$0xff] 0.0
    %19 = vst [vmem:[#allocation2 + $0x8] sm:$0xff] 0.0
  $region17: #{gru_model_forward.2} parent=0 // pred_fallthru
    _
  %v20 = vld [vmem:[%s1] sm:$0xff]
  %v21 = vld [vmem:[%s1 + $0x8] sm:$0xff]
  %v22 = vld [vmem:[%s1 + $0x10] sm:$0xff]
  %v23 = vld [vmem:[%s1 + $0x18] sm:$0xff]
  %v24 = vld [vmem:[%s1 + $0x20] sm:$0xff]
  %v25 = vld [vmem:[%s1 + $0x28] sm:$0xff]
  %v26 = vld [vmem:[%s1 + $0x30] sm:$0xff]
  %v27 = vld [vmem:[%s1 + $0x38] sm:$0xff]
  %v28 = vld [vmem:[%s1 + $0x40] sm:$0xff]
  %v29 = vld [vmem:[%s1 + $0x48] sm:$0xff]
  %v30 = vld [vmem:[%s1 + $0x50] sm:$0xff]
  %v31 = vld [vmem:[%s1 + $0x58] sm:$0xff]
  %v32 = vld [vmem:[%s1 + $0x60] sm:$0xff]
  %v33 = vld [vmem:[%s1 + $0x68] sm:$0xff]
  %v34 = vld [vmem:[%s1 + $0x70] sm:$0xff]
  %v35 = vld [vmem:[%s1 + $0x78] sm:$0xff]
  %v36 = vld [vmem:[%s1 + $0x80] sm:$0xff]
  %v37 = vld [vmem:[%s1 + $0x88] sm:$0xff]
  %v38 = vld [vmem:[%s1 + $0x90] sm:$0xff]
  %v39 = vld [vmem:[%s1 + $0x98] sm:$0xff]
  %v40 = vld [vmem:[%s1 + $0xa0] sm:$0xff]
  %v41 = vld [vmem:[%s1 + $0xa8] sm:$0xff]
  %v42 = vld [vmem:[%s1 + $0xb0] sm:$0xff]
  %v43 = vld [vmem:[%s1 + $0xb8] sm:$0xff]
  %v44 = vld [vmem:[%s1 + $0xc0] sm:$0xff]
  %v45 = vld [vmem:[%s1 + $0xc8] sm:$0xff]
  %v46 = vld [vmem:[%s1 + $0xd0] sm:$0xff]
  %v47 = vld [vmem:[%s1 + $0xd8] sm:$0xff]
  %v48 = vld [vmem:[%s1 + $0xe0] sm:$0xff]
  %v49 = vld [vmem:[%s1 + $0xe8] sm:$0xff]
  %v50 = vld [vmem:[%s1 + $0xf0] sm:$0xff]
  %v51 = vld [vmem:[%s1 + $0xf8] sm:$0xff]
  %v52 = vld [vmem:[%s1 + $0x100] sm:$0xff]
  %v53 = vld [vmem:[%s1 + $0x108] sm:$0xff]
  %v54 = vld [vmem:[%s1 + $0x110] sm:$0xff]
  %v55 = vld [vmem:[%s1 + $0x118] sm:$0xff]
  %v56 = vld [vmem:[%s1 + $0x120] sm:$0xff]
  %v57 = vld [vmem:[%s1 + $0x128] sm:$0xff]
  %v58 = vld [vmem:[%s1 + $0x130] sm:$0xff]
  %v59 = vld [vmem:[%s1 + $0x138] sm:$0xff]
  %v60 = vld [vmem:[%s1 + $0x140] sm:$0xff]
  %v61 = vld [vmem:[%s1 + $0x148] sm:$0xff]
  %v62 = vld [vmem:[%s1 + $0x150] sm:$0xff]
  %v63 = vld [vmem:[%s1 + $0x158] sm:$0xff]
  %v64 = vld [vmem:[%s1 + $0x160] sm:$0xff]
  %v65 = vld [vmem:[%s1 + $0x168] sm:$0xff]
  %v66 = vld [vmem:[%s1 + $0x170] sm:$0xff]
  %v67 = vld [vmem:[%s1 + $0x178] sm:$0xff]
  %v68 = vld [vmem:[%s2] sm:$0x7]
  %v70 = vlaneseq
  %v71 = vshrl.u32 %v70, 7
  %v72 = vsub.s32 0, %v71
  %v73 = vrot.slane %v68, %v72
  %v74 = vlaneseq
  %v75 = vshrl.u32 %v74, 7
  %v76 = vsub.s32 1, %v75
  %v77 = vrot.slane %v68, %v76
  %v78 = vlaneseq
  %v79 = vshrl.u32 %v78, 7
  %v80 = vsub.s32 2, %v79
  %v81 = vrot.slane %v68, %v80
  %v85 = vld [vmem:[#allocation2] sm:$0xff]
  %v86 = vld [vmem:[#allocation2 + $0x8] sm:$0xff]
  %v87 = vld [vmem:[%s0] sm:$0xff]
  %v88 = vld [vmem:[%s0 + $0x8] sm:$0xf]
  %v89 = vld [vmem:[%s0 + $0xc] sm:$0xff]
  %v90 = vld [vmem:[%s0 + $0x14] sm:$0xf]
  %v91 = vunpack.c.l.bf16 %v87
  %v92 = vunpack.c.h.bf16 %v87
  %v93 = vunpack.c.l.bf16 %v88
  %v94 = vunpack.c.l.bf16 %v89
  %v95 = vunpack.c.h.bf16 %v89
  %v96 = vunpack.c.l.bf16 %v90
  %97 = vmatprep.subr.mxu0 %v21
  %98 = vmatpush1.msra.mxu0 %v20
  %99 = vmatprep.subr.mxu0 %v24
  %100 = vmatpush1.msra.mxu0 %v23
  %101 = vmatprep.subr.mxu0 %v27
  %102 = vmatpush1.msra.mxu0 %v26
  %103 = vmatprep.subr.mxu0 %v30
  %104 = vmatpush1.msra.mxu0 %v29
  %105 = vmatprep.subr.mxu0 %v33
  %106 = vmatpush1.msra.mxu0 %v32
  %107 = vmatprep.subr.mxu0 %v36
  %108 = vmatpush1.msra.mxu0 %v35
  %109 = vmatprep.subr.mxu0 %v39
  %110 = vmatpush1.msra.mxu0 %v38
  %111 = vmatprep.subr.mxu0 %v42
  %112 = vmatpush1.msra.mxu0 %v41
  %113 = vmatprep.subr.mxu0 %v45
  %114 = vmatpush1.msra.mxu0 %v44
  %115 = vmatprep.subr.mxu0 %v48
  %116 = vmatpush1.msra.mxu0 %v47
  %117 = vmatprep.subr.mxu0 %v51
  %118 = vmatpush1.msra.mxu0 %v50
  %119 = vmatprep.subr.mxu0 %v54
  %120 = vmatpush1.msra.mxu0 %v53
  %121 = vmatprep.subr.mxu0 %v57
  %122 = vmatpush1.msra.mxu0 %v56
  %123 = vmatprep.subr.mxu0 %v60
  %124 = vmatpush1.msra.mxu0 %v59
  %125 = vmatprep.subr.mxu0 %v63
  %126 = vmatpush1.msra.mxu0 %v62
  %127 = vmatprep.subr.mxu0 %v66
  %128 = vmatpush1.msra.mxu0 %v65
  %129 = vmatprep.subr.mxu0 0.0
  %130 = vmatpush1.msra.mxu0 0.0
  %131 = vmatprep.subr.mxu0 0.0
  %132 = vmatpush1.msra.mxu0 0.0
  %133 = vmatprep.subr.mxu0 0.0
  %134 = vmatpush1.msra.mxu0 0.0
  %135 = vmatprep.subr.mxu0 0.0
  %136 = vmatpush1.msra.mxu0 0.0
  %137 = vmatprep.subr.mxu0 0.0
  %138 = vmatpush1.msra.mxu0 0.0
  %139 = vmatprep.subr.mxu0 0.0
  %140 = vmatpush1.msra.mxu0 0.0
  %141 = vmatprep.subr.mxu0 0.0
  %142 = vmatpush1.msra.mxu0 0.0
  %143 = vmatprep.subr.mxu0 0.0
  %144 = vmatpush1.msra.mxu0 0.0
  %145 = vmatprep.subr.mxu0 0.0
  %146 = vmatpush1.msra.mxu0 0.0
  %147 = vmatprep.subr.mxu0 0.0
  %148 = vmatpush1.msra.mxu0 0.0
  %149 = vmatprep.subr.mxu0 0.0
  %150 = vmatpush1.msra.mxu0 0.0
  %151 = vmatprep.subr.mxu0 0.0
  %152 = vmatpush1.msra.mxu0 0.0
  %153 = vmatprep.subr.mxu0 0.0
  %154 = vmatpush1.msra.mxu0 0.0
  %155 = vmatprep.subr.mxu0 0.0
  %156 = vmatpush1.msra.mxu0 0.0
  %157 = vmatprep.subr.mxu0 0.0
  %158 = vmatpush1.msra.mxu0 0.0
  %159 = vmatprep.subr.mxu0 0.0
  %160 = vmatpush1.msra.mxu0 0.0
  %161 = vmatprep.mubr.f32.mxu0 0.0
  %162 = vmatmul.mubr.f32.gmra.mrb[0].mxu0 %v85
  %v163 = vpop.f32.mrb[0].mxu0
  %v164 = vadd.f32 %v73, %v163
  %v165 = vpop.f32.mrb[0].mxu0
  %v166 = vadd.f32 %v77, %v165
  %167 = vmatprep.mubr.f32.mxu0 0.0
  %168 = vmatmul.mubr.f32.gmra.mrb[0].mxu0 %v86
  %v169 = vpop.f32.mrb[0].mxu0
  %v170 = vadd.f32 %v73, %v169
  %v171 = vpop.f32.mrb[0].mxu0
  %v172 = vadd.f32 %v77, %v171
  %173 = vdwg.mxu0
  %174 = vmatprep.subr.mxu0 0.0
  %175 = vmatpush1.msra.mxu0 %v22
  %176 = vmatprep.subr.mxu0 0.0
  %177 = vmatpush1.msra.mxu0 %v25
  %178 = vmatprep.subr.mxu0 0.0
  %179 = vmatpush1.msra.mxu0 %v28
  %180 = vmatprep.subr.mxu0 0.0
  %181 = vmatpush1.msra.mxu0 %v31
  %182 = vmatprep.subr.mxu0 0.0
  %183 = vmatpush1.msra.mxu0 %v34
  %184 = vmatprep.subr.mxu0 0.0
  %185 = vmatpush1.msra.mxu0 %v37
  %186 = vmatprep.subr.mxu0 0.0
  %187 = vmatpush1.msra.mxu0 %v40
  %188 = vmatprep.subr.mxu0 0.0
  %189 = vmatpush1.msra.mxu0 %v43
  %190 = vmatprep.subr.mxu0 0.0
  %191 = vmatpush1.msra.mxu0 %v46
  %192 = vmatprep.subr.mxu0 0.0
  %193 = vmatpush1.msra.mxu0 %v49
  %194 = vmatprep.subr.mxu0 0.0
  %195 = vmatpush1.msra.mxu0 %v52
  %196 = vmatprep.subr.mxu0 0.0
  %197 = vmatpush1.msra.mxu0 %v55
  %198 = vmatprep.subr.mxu0 0.0
  %199 = vmatpush1.msra.mxu0 %v58
  %200 = vmatprep.subr.mxu0 0.0
  %201 = vmatpush1.msra.mxu0 %v61
  %202 = vmatprep.subr.mxu0 0.0
  %203 = vmatpush1.msra.mxu0 %v64
  %204 = vmatprep.subr.mxu0 0.0
  %205 = vmatpush1.msra.mxu0 %v67
  %206 = vmatprep.subr.mxu0 0.0
  %207 = vmatpush1.msra.mxu0 0.0
  %208 = vmatprep.subr.mxu0 0.0
  %209 = vmatpush1.msra.mxu0 0.0
  %210 = vmatprep.subr.mxu0 0.0
  %211 = vmatpush1.msra.mxu0 0.0
  %212 = vmatprep.subr.mxu0 0.0
  %213 = vmatpush1.msra.mxu0 0.0
  %214 = vmatprep.subr.mxu0 0.0
  %215 = vmatpush1.msra.mxu0 0.0
  %216 = vmatprep.subr.mxu0 0.0
  %217 = vmatpush1.msra.mxu0 0.0
  %218 = vmatprep.subr.mxu0 0.0
  %219 = vmatpush1.msra.mxu0 0.0
  %220 = vmatprep.subr.mxu0 0.0
  %221 = vmatpush1.msra.mxu0 0.0
  %222 = vmatprep.subr.mxu0 0.0
  %223 = vmatpush1.msra.mxu0 0.0
  %224 = vmatprep.subr.mxu0 0.0
  %225 = vmatpush1.msra.mxu0 0.0
  %226 = vmatprep.subr.mxu0 0.0
  %227 = vmatpush1.msra.mxu0 0.0
  %228 = vmatprep.subr.mxu0 0.0
  %229 = vmatpush1.msra.mxu0 0.0
  %230 = vmatprep.subr.mxu0 0.0
  %231 = vmatpush1.msra.mxu0 0.0
  %232 = vmatprep.subr.mxu0 0.0
  %233 = vmatpush1.msra.mxu0 0.0
  %234 = vmatprep.subr.mxu0 0.0
  %235 = vmatpush1.msra.mxu0 0.0
  %236 = vmatprep.subr.mxu0 0.0
  %237 = vmatpush1.msra.mxu0 0.0
  %238 = vmatprep.mubr.f32.mxu0 0.0
  %239 = vmatmul.mubr.f32.gmra.mrb[0].mxu0 %v85
  %v240 = vpop.f32.mrb[0].mxu0
  %v241 = vadd.f32 %v81, %v240
  %v242 = vpop.f32.mrb[0].mxu0
  %243 = vmatprep.mubr.f32.mxu0 0.0
  %244 = vmatmul.mubr.f32.gmra.mrb[0].mxu0 %v86
  %v245 = vpop.f32.mrb[0].mxu0
  %v246 = vadd.f32 %v81, %v245
  %v247 = vpop.f32.mrb[0].mxu0
  %248 = vdwg.mxu0
  %v249 = vadd.f32 %v91, %v164
  %v250 = vadd.f32 %v94, %v170
  %v251 = vxor.u32 %v249, 2147483648
  %v252 = vxor.u32 %v250, 2147483648
  %v253 = vmul.f32 %v251, 1.442695
  %v254 = vpow.pop %v253
  %v255 = vmul.f32 %v252, 1.442695
  %v256 = vpow.pop %v255
  %v257 = vadd.f32 %v254, 1.0
  %v258 = vadd.f32 %v256, 1.0
  %v259 = vrcp.pop %v257
  %v260 = vmul.f32 1.0, %v259
  %v261 = vrcp.pop %v258
  %v262 = vmul.f32 1.0, %v261
  %v263 = vadd.f32 %v92, %v166
  %v264 = vadd.f32 %v95, %v172
  %v265 = vxor.u32 %v263, 2147483648
  %v266 = vxor.u32 %v264, 2147483648
  %v267 = vmul.f32 %v265, 1.442695
  %v268 = vpow.pop %v267
  %v269 = vmul.f32 %v266, 1.442695
  %v270 = vpow.pop %v269
  %v271 = vadd.f32 %v268, 1.0
  %v272 = vadd.f32 %v270, 1.0
  %v273 = vrcp.pop %v271
  %v274 = vmul.f32 1.0, %v273
  %v275 = vrcp.pop %v272
  %v276 = vmul.f32 1.0, %v275
  %v277 = vmul.f32 %v260, %v241
  %v278 = vmul.f32 %v262, %v246
  %v279 = vadd.f32 %v93, %v277
  %v280 = vadd.f32 %v96, %v278
  %v281 = vtanh.pop %v279
  %v282 = vtanh.pop %v280
  %v283 = vsub.f32 1.0, %v274
  %v284 = vsub.f32 1.0, %v276
  %v285 = vmul.f32 %v283, %v281
  %v286 = vmul.f32 %v284, %v282
  %v287 = vmul.f32 %v274, %v85
  %v288 = vmul.f32 %v276, %v86
  %v289 = vadd.f32 %v285, %v287
  %v290 = vadd.f32 %v286, %v288
  %s291 = scalar_lea.vmem %s0, 24
  %v292 = vld [vmem:[%s291] sm:$0xff]
  %v293 = vld [vmem:[%s291 + $0x8] sm:$0xf]
  %v294 = vld [vmem:[%s291 + $0xc] sm:$0xff]
  %v295 = vld [vmem:[%s291 + $0x14] sm:$0xf]
  %v296 = vunpack.c.l.bf16 %v292
  %v297 = vunpack.c.h.bf16 %v292
  %v298 = vunpack.c.l.bf16 %v293
  %v299 = vunpack.c.l.bf16 %v294
  %v300 = vunpack.c.h.bf16 %v294
  %v301 = vunpack.c.l.bf16 %v295
  %302 = vmatprep.subr.mxu0 %v21
  %303 = vmatpush1.msra.mxu0 %v20
  %304 = vmatprep.subr.mxu0 %v24
  %305 = vmatpush1.msra.mxu0 %v23
  %306 = vmatprep.subr.mxu0 %v27
  %307 = vmatpush1.msra.mxu0 %v26
  %308 = vmatprep.subr.mxu0 %v30
  %309 = vmatpush1.msra.mxu0 %v29
  %310 = vmatprep.subr.mxu0 %v33
  %311 = vmatpush1.msra.mxu0 %v32
  %312 = vmatprep.subr.mxu0 %v36
  %313 = vmatpush1.msra.mxu0 %v35
  %314 = vmatprep.subr.mxu0 %v39
  %315 = vmatpush1.msra.mxu0 %v38
  %316 = vmatprep.subr.mxu0 %v42
  %317 = vmatpush1.msra.mxu0 %v41
  %318 = vmatprep.subr.mxu0 %v45
  %319 = vmatpush1.msra.mxu0 %v44
  %320 = vmatprep.subr.mxu0 %v48
  %321 = vmatpush1.msra.mxu0 %v47
  %322 = vmatprep.subr.mxu0 %v51
  %323 = vmatpush1.msra.mxu0 %v50
  %324 = vmatprep.subr.mxu0 %v54
  %325 = vmatpush1.msra.mxu0 %v53
  %326 = vmatprep.subr.mxu0 %v57
  %327 = vmatpush1.msra.mxu0 %v56
  %328 = vmatprep.subr.mxu0 %v60
  %329 = vmatpush1.msra.mxu0 %v59
  %330 = vmatprep.subr.mxu0 %v63
  %331 = vmatpush1.msra.mxu0 %v62
  %332 = vmatprep.subr.mxu0 %v66
  %333 = vmatpush1.msra.mxu0 %v65
  %334 = vmatprep.subr.mxu0 0.0
  %335 = vmatpush1.msra.mxu0 0.0
  %336 = vmatprep.subr.mxu0 0.0
  %337 = vmatpush1.msra.mxu0 0.0
  %338 = vmatprep.subr.mxu0 0.0
  %339 = vmatpush1.msra.mxu0 0.0
  %340 = vmatprep.subr.mxu0 0.0
  %341 = vmatpush1.msra.mxu0 0.0
  %342 = vmatprep.subr.mxu0 0.0
  %343 = vmatpush1.msra.mxu0 0.0
  %344 = vmatprep.subr.mxu0 0.0
  %345 = vmatpush1.msra.mxu0 0.0
  %346 = vmatprep.subr.mxu0 0.0
  %347 = vmatpush1.msra.mxu0 0.0
  %348 = vmatprep.subr.mxu0 0.0
  %349 = vmatpush1.msra.mxu0 0.0
  %350 = vmatprep.subr.mxu0 0.0
  %351 = vmatpush1.msra.mxu0 0.0
  %352 = vmatprep.subr.mxu0 0.0
  %353 = vmatpush1.msra.mxu0 0.0
  %354 = vmatprep.subr.mxu0 0.0
  %355 = vmatpush1.msra.mxu0 0.0
  %356 = vmatprep.subr.mxu0 0.0
  %357 = vmatpush1.msra.mxu0 0.0
  %358 = vmatprep.subr.mxu0 0.0
  %359 = vmatpush1.msra.mxu0 0.0
  %360 = vmatprep.subr.mxu0 0.0
  %361 = vmatpush1.msra.mxu0 0.0
  %362 = vmatprep.subr.mxu0 0.0
  %363 = vmatpush1.msra.mxu0 0.0
  %364 = vmatprep.subr.mxu0 0.0
  %365 = vmatpush1.msra.mxu0 0.0
  %366 = vmatprep.mubr.f32.mxu0 0.0
  %367 = vmatmul.mubr.f32.gmra.mrb[0].mxu0 %v289
  %v368 = vpop.f32.mrb[0].mxu0
  %v369 = vadd.f32 %v73, %v368
  %v370 = vpop.f32.mrb[0].mxu0
  %v371 = vadd.f32 %v77, %v370
  %372 = vmatprep.mubr.f32.mxu0 0.0
  %373 = vmatmul.mubr.f32.gmra.mrb[0].mxu0 %v290
  %v374 = vpop.f32.mrb[0].mxu0
  %v375 = vadd.f32 %v73, %v374
  %v376 = vpop.f32.mrb[0].mxu0
  %v377 = vadd.f32 %v77, %v376
  %378 = vdwg.mxu0
  %379 = vmatprep.subr.mxu0 0.0
  %380 = vmatpush1.msra.mxu0 %v22
  %381 = vmatprep.subr.mxu0 0.0
  %382 = vmatpush1.msra.mxu0 %v25
  %383 = vmatprep.subr.mxu0 0.0
  %384 = vmatpush1.msra.mxu0 %v28
  %385 = vmatprep.subr.mxu0 0.0
  %386 = vmatpush1.msra.mxu0 %v31
  %387 = vmatprep.subr.mxu0 0.0
  %388 = vmatpush1.msra.mxu0 %v34
  %389 = vmatprep.subr.mxu0 0.0
  %390 = vmatpush1.msra.mxu0 %v37
  %391 = vmatprep.subr.mxu0 0.0
  %392 = vmatpush1.msra.mxu0 %v40
  %393 = vmatprep.subr.mxu0 0.0
  %394 = vmatpush1.msra.mxu0 %v43
  %395 = vmatprep.subr.mxu0 0.0
  %396 = vmatpush1.msra.mxu0 %v46
  %397 = vmatprep.subr.mxu0 0.0
  %398 = vmatpush1.msra.mxu0 %v49
  %399 = vmatprep.subr.mxu0 0.0
  %400 = vmatpush1.msra.mxu0 %v52
  %401 = vmatprep.subr.mxu0 0.0
  %402 = vmatpush1.msra.mxu0 %v55
  %403 = vmatprep.subr.mxu0 0.0
  %404 = vmatpush1.msra.mxu0 %v58
  %405 = vmatprep.subr.mxu0 0.0
  %406 = vmatpush1.msra.mxu0 %v61
  %407 = vmatprep.subr.mxu0 0.0
  %408 = vmatpush1.msra.mxu0 %v64
  %409 = vmatprep.subr.mxu0 0.0
  %410 = vmatpush1.msra.mxu0 %v67
  %411 = vmatprep.subr.mxu0 0.0
  %412 = vmatpush1.msra.mxu0 0.0
  %413 = vmatprep.subr.mxu0 0.0
  %414 = vmatpush1.msra.mxu0 0.0
  %415 = vmatprep.subr.mxu0 0.0
  %416 = vmatpush1.msra.mxu0 0.0
  %417 = vmatprep.subr.mxu0 0.0
  %418 = vmatpush1.msra.mxu0 0.0
  %419 = vmatprep.subr.mxu0 0.0
  %420 = vmatpush1.msra.mxu0 0.0
  %421 = vmatprep.subr.mxu0 0.0
  %422 = vmatpush1.msra.mxu0 0.0
  %423 = vmatprep.subr.mxu0 0.0
  %424 = vmatpush1.msra.mxu0 0.0
  %425 = vmatprep.subr.mxu0 0.0
  %426 = vmatpush1.msra.mxu0 0.0
  %427 = vmatprep.subr.mxu0 0.0
  %428 = vmatpush1.msra.mxu0 0.0
  %429 = vmatprep.subr.mxu0 0.0
  %430 = vmatpush1.msra.mxu0 0.0
  %431 = vmatprep.subr.mxu0 0.0
  %432 = vmatpush1.msra.mxu0 0.0
  %433 = vmatprep.subr.mxu0 0.0
  %434 = vmatpush1.msra.mxu0 0.0
  %435 = vmatprep.subr.mxu0 0.0
  %436 = vmatpush1.msra.mxu0 0.0
  %437 = vmatprep.subr.mxu0 0.0
  %438 = vmatpush1.msra.mxu0 0.0
  %439 = vmatprep.subr.mxu0 0.0
  %440 = vmatpush1.msra.mxu0 0.0
  %441 = vmatprep.subr.mxu0 0.0
  %442 = vmatpush1.msra.mxu0 0.0
  %443 = vmatprep.mubr.f32.mxu0 0.0
  %444 = vmatmul.mubr.f32.gmra.mrb[0].mxu0 %v289
  %v445 = vpop.f32.mrb[0].mxu0
  %v446 = vadd.f32 %v81, %v445
  %v447 = vpop.f32.mrb[0].mxu0
  %448 = vmatprep.mubr.f32.mxu0 0.0
  %449 = vmatmul.mubr.f32.gmra.mrb[0].mxu0 %v290
  %v450 = vpop.f32.mrb[0].mxu0
  %v451 = vadd.f32 %v81, %v450
  %v452 = vpop.f32.mrb[0].mxu0
  %453 = vdwg.mxu0
  %v454 = vadd.f32 %v296, %v369
  %v455 = vadd.f32 %v299, %v375
  %v456 = vxor.u32 %v454, 2147483648
  %v457 = vxor.u32 %v455, 2147483648
  %v458 = vmul.f32 %v456, 1.442695
  %v459 = vpow.pop %v458
  %v460 = vmul.f32 %v457, 1.442695
  %v461 = vpow.pop %v460
  %v462 = vadd.f32 %v459, 1.0
  %v463 = vadd.f32 %v461, 1.0
  %v464 = vrcp.pop %v462
  %v465 = vmul.f32 1.0, %v464
  %v466 = vrcp.pop %v463
  %v467 = vmul.f32 1.0, %v466
  %v468 = vadd.f32 %v297, %v371
  %v469 = vadd.f32 %v300, %v377
  %v470 = vxor.u32 %v468, 2147483648
  %v471 = vxor.u32 %v469, 2147483648
  %v472 = vmul.f32 %v470, 1.442695
  %v473 = vpow.pop %v472
  %v474 = vmul.f32 %v471, 1.442695
  %v475 = vpow.pop %v474
  %v476 = vadd.f32 %v473, 1.0
  %v477 = vadd.f32 %v475, 1.0
  %v478 = vrcp.pop %v476
  %v479 = vmul.f32 1.0, %v478
  %v480 = vrcp.pop %v477
  %v481 = vmul.f32 1.0, %v480
  %v482 = vmul.f32 %v465, %v446
  %v483 = vmul.f32 %v467, %v451
  %v484 = vadd.f32 %v298, %v482
  %v485 = vadd.f32 %v301, %v483
  %v486 = vtanh.pop %v484
  %v487 = vtanh.pop %v485
  %v488 = vsub.f32 1.0, %v479
  %v489 = vsub.f32 1.0, %v481
  %v490 = vmul.f32 %v488, %v486
  %v491 = vmul.f32 %v489, %v487
  %v492 = vmul.f32 %v479, %v289
  %v493 = vmul.f32 %v481, %v290
  %v494 = vadd.f32 %v490, %v492
  %v495 = vadd.f32 %v491, %v493
  %s496 = scalar_lea.vmem %s0, 48
  %v497 = vld [vmem:[%s496] sm:$0xff]
  %v498 = vld [vmem:[%s496 + $0x8] sm:$0xf]
  %v499 = vld [vmem:[%s496 + $0xc] sm:$0xff]
  %v500 = vld [vmem:[%s496 + $0x14] sm:$0xf]
  %v501 = vunpack.c.l.bf16 %v497
  %v502 = vunpack.c.h.bf16 %v497
  %v503 = vunpack.c.l.bf16 %v498
  %v504 = vunpack.c.l.bf16 %v499
  %v505 = vunpack.c.h.bf16 %v499
  %v506 = vunpack.c.l.bf16 %v500
  %507 = vmatprep.subr.mxu0 %v21
  %508 = vmatpush1.msra.mxu0 %v20
  %509 = vmatprep.subr.mxu0 %v24
  %510 = vmatpush1.msra.mxu0 %v23
  %511 = vmatprep.subr.mxu0 %v27
  %512 = vmatpush1.msra.mxu0 %v26
  %513 = vmatprep.subr.mxu0 %v30
  %514 = vmatpush1.msra.mxu0 %v29
  %515 = vmatprep.subr.mxu0 %v33
  %516 = vmatpush1.msra.mxu0 %v32
  %517 = vmatprep.subr.mxu0 %v36
  %518 = vmatpush1.msra.mxu0 %v35
  %519 = vmatprep.subr.mxu0 %v39
  %520 = vmatpush1.msra.mxu0 %v38
  %521 = vmatprep.subr.mxu0 %v42
  %522 = vmatpush1.msra.mxu0 %v41
  %523 = vmatprep.subr.mxu0 %v45
  %524 = vmatpush1.msra.mxu0 %v44
  %525 = vmatprep.subr.mxu0 %v48
  %526 = vmatpush1.msra.mxu0 %v47
  %527 = vmatprep.subr.mxu0 %v51
  %528 = vmatpush1.msra.mxu0 %v50
  %529 = vmatprep.subr.mxu0 %v54
  %530 = vmatpush1.msra.mxu0 %v53
  %531 = vmatprep.subr.mxu0 %v57
  %532 = vmatpush1.msra.mxu0 %v56
  %533 = vmatprep.subr.mxu0 %v60
  %534 = vmatpush1.msra.mxu0 %v59
  %535 = vmatprep.subr.mxu0 %v63
  %536 = vmatpush1.msra.mxu0 %v62
  %537 = vmatprep.subr.mxu0 %v66
  %538 = vmatpush1.msra.mxu0 %v65
  %539 = vmatprep.subr.mxu0 0.0
  %540 = vmatpush1.msra.mxu0 0.0
  %541 = vmatprep.subr.mxu0 0.0
  %542 = vmatpush1.msra.mxu0 0.0
  %543 = vmatprep.subr.mxu0 0.0
  %544 = vmatpush1.msra.mxu0 0.0
  %545 = vmatprep.subr.mxu0 0.0
  %546 = vmatpush1.msra.mxu0 0.0
  %547 = vmatprep.subr.mxu0 0.0
  %548 = vmatpush1.msra.mxu0 0.0
  %549 = vmatprep.subr.mxu0 0.0
  %550 = vmatpush1.msra.mxu0 0.0
  %551 = vmatprep.subr.mxu0 0.0
  %552 = vmatpush1.msra.mxu0 0.0
  %553 = vmatprep.subr.mxu0 0.0
  %554 = vmatpush1.msra.mxu0 0.0
  %555 = vmatprep.subr.mxu0 0.0
  %556 = vmatpush1.msra.mxu0 0.0
  %557 = vmatprep.subr.mxu0 0.0
  %558 = vmatpush1.msra.mxu0 0.0
  %559 = vmatprep.subr.mxu0 0.0
  %560 = vmatpush1.msra.mxu0 0.0
  %561 = vmatprep.subr.mxu0 0.0
  %562 = vmatpush1.msra.mxu0 0.0
  %563 = vmatprep.subr.mxu0 0.0
  %564 = vmatpush1.msra.mxu0 0.0
  %565 = vmatprep.subr.mxu0 0.0
  %566 = vmatpush1.msra.mxu0 0.0
  %567 = vmatprep.subr.mxu0 0.0
  %568 = vmatpush1.msra.mxu0 0.0
  %569 = vmatprep.subr.mxu0 0.0
  %570 = vmatpush1.msra.mxu0 0.0
  %571 = vmatprep.mubr.f32.mxu0 0.0
  %572 = vmatmul.mubr.f32.gmra.mrb[0].mxu0 %v494
  %v573 = vpop.f32.mrb[0].mxu0
  %v574 = vadd.f32 %v73, %v573
  %v575 = vpop.f32.mrb[0].mxu0
  %v576 = vadd.f32 %v77, %v575
  %577 = vmatprep.mubr.f32.mxu0 0.0
  %578 = vmatmul.mubr.f32.gmra.mrb[0].mxu0 %v495
  %v579 = vpop.f32.mrb[0].mxu0
  %v580 = vadd.f32 %v73, %v579
  %v581 = vpop.f32.mrb[0].mxu0
  %v582 = vadd.f32 %v77, %v581
  %583 = vdwg.mxu0
  %584 = vmatprep.subr.mxu0 0.0
  %585 = vmatpush1.msra.mxu0 %v22
  %586 = vmatprep.subr.mxu0 0.0
  %587 = vmatpush1.msra.mxu0 %v25
  %588 = vmatprep.subr.mxu0 0.0
  %589 = vmatpush1.msra.mxu0 %v28
  %590 = vmatprep.subr.mxu0 0.0
  %591 = vmatpush1.msra.mxu0 %v31
  %592 = vmatprep.subr.mxu0 0.0
  %593 = vmatpush1.msra.mxu0 %v34
  %594 = vmatprep.subr.mxu0 0.0
  %595 = vmatpush1.msra.mxu0 %v37
  %596 = vmatprep.subr.mxu0 0.0
  %597 = vmatpush1.msra.mxu0 %v40
  %598 = vmatprep.subr.mxu0 0.0
  %599 = vmatpush1.msra.mxu0 %v43
  %600 = vmatprep.subr.mxu0 0.0
  %601 = vmatpush1.msra.mxu0 %v46
  %602 = vmatprep.subr.mxu0 0.0
  %603 = vmatpush1.msra.mxu0 %v49
  %604 = vmatprep.subr.mxu0 0.0
  %605 = vmatpush1.msra.mxu0 %v52
  %606 = vmatprep.subr.mxu0 0.0
  %607 = vmatpush1.msra.mxu0 %v55
  %608 = vmatprep.subr.mxu0 0.0
  %609 = vmatpush1.msra.mxu0 %v58
  %610 = vmatprep.subr.mxu0 0.0
  %611 = vmatpush1.msra.mxu0 %v61
  %612 = vmatprep.subr.mxu0 0.0
  %613 = vmatpush1.msra.mxu0 %v64
  %614 = vmatprep.subr.mxu0 0.0
  %615 = vmatpush1.msra.mxu0 %v67
  %616 = vmatprep.subr.mxu0 0.0
  %617 = vmatpush1.msra.mxu0 0.0
  %618 = vmatprep.subr.mxu0 0.0
  %619 = vmatpush1.msra.mxu0 0.0
  %620 = vmatprep.subr.mxu0 0.0
  %621 = vmatpush1.msra.mxu0 0.0
  %622 = vmatprep.subr.mxu0 0.0
  %623 = vmatpush1.msra.mxu0 0.0
  %624 = vmatprep.subr.mxu0 0.0
  %625 = vmatpush1.msra.mxu0 0.0
  %626 = vmatprep.subr.mxu0 0.0
  %627 = vmatpush1.msra.mxu0 0.0
  %628 = vmatprep.subr.mxu0 0.0
  %629 = vmatpush1.msra.mxu0 0.0
  %630 = vmatprep.subr.mxu0 0.0
  %631 = vmatpush1.msra.mxu0 0.0
  %632 = vmatprep.subr.mxu0 0.0
  %633 = vmatpush1.msra.mxu0 0.0
  %634 = vmatprep.subr.mxu0 0.0
  %635 = vmatpush1.msra.mxu0 0.0
  %636 = vmatprep.subr.mxu0 0.0
  %637 = vmatpush1.msra.mxu0 0.0
  %638 = vmatprep.subr.mxu0 0.0
  %639 = vmatpush1.msra.mxu0 0.0
  %640 = vmatprep.subr.mxu0 0.0
  %641 = vmatpush1.msra.mxu0 0.0
  %642 = vmatprep.subr.mxu0 0.0
  %643 = vmatpush1.msra.mxu0 0.0
  %644 = vmatprep.subr.mxu0 0.0
  %645 = vmatpush1.msra.mxu0 0.0
  %646 = vmatprep.subr.mxu0 0.0
  %647 = vmatpush1.msra.mxu0 0.0
  %648 = vmatprep.mubr.f32.mxu0 0.0
  %649 = vmatmul.mubr.f32.gmra.mrb[0].mxu0 %v494
  %v650 = vpop.f32.mrb[0].mxu0
  %v651 = vadd.f32 %v81, %v650
  %v652 = vpop.f32.mrb[0].mxu0
  %653 = vmatprep.mubr.f32.mxu0 0.0
  %654 = vmatmul.mubr.f32.gmra.mrb[0].mxu0 %v495
  %v655 = vpop.f32.mrb[0].mxu0
  %v656 = vadd.f32 %v81, %v655
  %v657 = vpop.f32.mrb[0].mxu0
  %658 = vdwg.mxu0
  %v659 = vadd.f32 %v501, %v574
  %v660 = vadd.f32 %v504, %v580
  %v661 = vxor.u32 %v659, 2147483648
  %v662 = vxor.u32 %v660, 2147483648
  %v663 = vmul.f32 %v661, 1.442695
  %v664 = vpow.pop %v663
  %v665 = vmul.f32 %v662, 1.442695
  %v666 = vpow.pop %v665
  %v667 = vadd.f32 %v664, 1.0
  %v668 = vadd.f32 %v666, 1.0
  %v669 = vrcp.pop %v667
  %v670 = vmul.f32 1.0, %v669
  %v671 = vrcp.pop %v668
  %v672 = vmul.f32 1.0, %v671
  %v673 = vadd.f32 %v502, %v576
  %v674 = vadd.f32 %v505, %v582
  %v675 = vxor.u32 %v673, 2147483648
  %v676 = vxor.u32 %v674, 2147483648
  %v677 = vmul.f32 %v675, 1.442695
  %v678 = vpow.pop %v677
  %v679 = vmul.f32 %v676, 1.442695
  %v680 = vpow.pop %v679
  %v681 = vadd.f32 %v678, 1.0
  %v682 = vadd.f32 %v680, 1.0
  %v683 = vrcp.pop %v681
  %v684 = vmul.f32 1.0, %v683
  %v685 = vrcp.pop %v682
  %v686 = vmul.f32 1.0, %v685
  %v687 = vmul.f32 %v670, %v651
  %v688 = vmul.f32 %v672, %v656
  %v689 = vadd.f32 %v503, %v687
  %v690 = vadd.f32 %v506, %v688
  %v691 = vtanh.pop %v689
  %v692 = vtanh.pop %v690
  %v693 = vsub.f32 1.0, %v684
  %v694 = vsub.f32 1.0, %v686
  %v695 = vmul.f32 %v693, %v691
  %v696 = vmul.f32 %v694, %v692
  %v697 = vmul.f32 %v684, %v494
  %v698 = vmul.f32 %v686, %v495
  %v699 = vadd.f32 %v695, %v697
  %v700 = vadd.f32 %v696, %v698
  %s701 = scalar_lea.vmem %s0, 72
  %v702 = vld [vmem:[%s701] sm:$0xff]
  %v703 = vld [vmem:[%s701 + $0x8] sm:$0xf]
  %v704 = vld [vmem:[%s701 + $0xc] sm:$0xff]
  %v705 = vld [vmem:[%s701 + $0x14] sm:$0xf]
  %v706 = vunpack.c.l.bf16 %v702
  %v707 = vunpack.c.h.bf16 %v702
  %v708 = vunpack.c.l.bf16 %v703
  %v709 = vunpack.c.l.bf16 %v704
  %v710 = vunpack.c.h.bf16 %v704
  %v711 = vunpack.c.l.bf16 %v705
  %712 = vmatprep.subr.mxu0 %v21
  %713 = vmatpush1.msra.mxu0 %v20
  %714 = vmatprep.subr.mxu0 %v24
  %715 = vmatpush1.msra.mxu0 %v23
  %716 = vmatprep.subr.mxu0 %v27
  %717 = vmatpush1.msra.mxu0 %v26
  %718 = vmatprep.subr.mxu0 %v30
  %719 = vmatpush1.msra.mxu0 %v29
  %720 = vmatprep.subr.mxu0 %v33
  %721 = vmatpush1.msra.mxu0 %v32
  %722 = vmatprep.subr.mxu0 %v36
  %723 = vmatpush1.msra.mxu0 %v35
  %724 = vmatprep.subr.mxu0 %v39
  %725 = vmatpush1.msra.mxu0 %v38
  %726 = vmatprep.subr.mxu0 %v42
  %727 = vmatpush1.msra.mxu0 %v41
  %728 = vmatprep.subr.mxu0 %v45
  %729 = vmatpush1.msra.mxu0 %v44
  %730 = vmatprep.subr.mxu0 %v48
  %731 = vmatpush1.msra.mxu0 %v47
  %732 = vmatprep.subr.mxu0 %v51
  %733 = vmatpush1.msra.mxu0 %v50
  %734 = vmatprep.subr.mxu0 %v54
  %735 = vmatpush1.msra.mxu0 %v53
  %736 = vmatprep.subr.mxu0 %v57
  %737 = vmatpush1.msra.mxu0 %v56
  %738 = vmatprep.subr.mxu0 %v60
  %739 = vmatpush1.msra.mxu0 %v59
  %740 = vmatprep.subr.mxu0 %v63
  %741 = vmatpush1.msra.mxu0 %v62
  %742 = vmatprep.subr.mxu0 %v66
  %743 = vmatpush1.msra.mxu0 %v65
  %744 = vmatprep.subr.mxu0 0.0
  %745 = vmatpush1.msra.mxu0 0.0
  %746 = vmatprep.subr.mxu0 0.0
  %747 = vmatpush1.msra.mxu0 0.0
  %748 = vmatprep.subr.mxu0 0.0
  %749 = vmatpush1.msra.mxu0 0.0
  %750 = vmatprep.subr.mxu0 0.0
  %751 = vmatpush1.msra.mxu0 0.0
  %752 = vmatprep.subr.mxu0 0.0
  %753 = vmatpush1.msra.mxu0 0.0
  %754 = vmatprep.subr.mxu0 0.0
  %755 = vmatpush1.msra.mxu0 0.0
  %756 = vmatprep.subr.mxu0 0.0
  %757 = vmatpush1.msra.mxu0 0.0
  %758 = vmatprep.subr.mxu0 0.0
  %759 = vmatpush1.msra.mxu0 0.0
  %760 = vmatprep.subr.mxu0 0.0
  %761 = vmatpush1.msra.mxu0 0.0
  %762 = vmatprep.subr.mxu0 0.0
  %763 = vmatpush1.msra.mxu0 0.0
  %764 = vmatprep.subr.mxu0 0.0
  %765 = vmatpush1.msra.mxu0 0.0
  %766 = vmatprep.subr.mxu0 0.0
  %767 = vmatpush1.msra.mxu0 0.0
  %768 = vmatprep.subr.mxu0 0.0
  %769 = vmatpush1.msra.mxu0 0.0
  %770 = vmatprep.subr.mxu0 0.0
  %771 = vmatpush1.msra.mxu0 0.0
  %772 = vmatprep.subr.mxu0 0.0
  %773 = vmatpush1.msra.mxu0 0.0
  %774 = vmatprep.subr.mxu0 0.0
  %775 = vmatpush1.msra.mxu0 0.0
  %776 = vmatprep.mubr.f32.mxu0 0.0
  %777 = vmatmul.mubr.f32.gmra.mrb[0].mxu0 %v699
  %v778 = vpop.f32.mrb[0].mxu0
  %v779 = vadd.f32 %v73, %v778
  %v780 = vpop.f32.mrb[0].mxu0
  %v781 = vadd.f32 %v77, %v780
  %782 = vmatprep.mubr.f32.mxu0 0.0
  %783 = vmatmul.mubr.f32.gmra.mrb[0].mxu0 %v700
  %v784 = vpop.f32.mrb[0].mxu0
  %v785 = vadd.f32 %v73, %v784
  %v786 = vpop.f32.mrb[0].mxu0
  %v787 = vadd.f32 %v77, %v786
  %788 = vdwg.mxu0
  %789 = vmatprep.subr.mxu0 0.0
  %790 = vmatpush1.msra.mxu0 %v22
  %791 = vmatprep.subr.mxu0 0.0
  %792 = vmatpush1.msra.mxu0 %v25
  %793 = vmatprep.subr.mxu0 0.0
  %794 = vmatpush1.msra.mxu0 %v28
  %795 = vmatprep.subr.mxu0 0.0
  %796 = vmatpush1.msra.mxu0 %v31
  %797 = vmatprep.subr.mxu0 0.0
  %798 = vmatpush1.msra.mxu0 %v34
  %799 = vmatprep.subr.mxu0 0.0
  %800 = vmatpush1.msra.mxu0 %v37
  %801 = vmatprep.subr.mxu0 0.0
  %802 = vmatpush1.msra.mxu0 %v40
  %803 = vmatprep.subr.mxu0 0.0
  %804 = vmatpush1.msra.mxu0 %v43
  %805 = vmatprep.subr.mxu0 0.0
  %806 = vmatpush1.msra.mxu0 %v46
  %807 = vmatprep.subr.mxu0 0.0
  %808 = vmatpush1.msra.mxu0 %v49
  %809 = vmatprep.subr.mxu0 0.0
  %810 = vmatpush1.msra.mxu0 %v52
  %811 = vmatprep.subr.mxu0 0.0
  %812 = vmatpush1.msra.mxu0 %v55
  %813 = vmatprep.subr.mxu0 0.0
  %814 = vmatpush1.msra.mxu0 %v58
  %815 = vmatprep.subr.mxu0 0.0
  %816 = vmatpush1.msra.mxu0 %v61
  %817 = vmatprep.subr.mxu0 0.0
  %818 = vmatpush1.msra.mxu0 %v64
  %819 = vmatprep.subr.mxu0 0.0
  %820 = vmatpush1.msra.mxu0 %v67
  %821 = vmatprep.subr.mxu0 0.0
  %822 = vmatpush1.msra.mxu0 0.0
  %823 = vmatprep.subr.mxu0 0.0
  %824 = vmatpush1.msra.mxu0 0.0
  %825 = vmatprep.subr.mxu0 0.0
  %826 = vmatpush1.msra.mxu0 0.0
  %827 = vmatprep.subr.mxu0 0.0
  %828 = vmatpush1.msra.mxu0 0.0
  %829 = vmatprep.subr.mxu0 0.0
  %830 = vmatpush1.msra.mxu0 0.0
  %831 = vmatprep.subr.mxu0 0.0
  %832 = vmatpush1.msra.mxu0 0.0
  %833 = vmatprep.subr.mxu0 0.0
  %834 = vmatpush1.msra.mxu0 0.0
  %835 = vmatprep.subr.mxu0 0.0
  %836 = vmatpush1.msra.mxu0 0.0
  %837 = vmatprep.subr.mxu0 0.0
  %838 = vmatpush1.msra.mxu0 0.0
  %839 = vmatprep.subr.mxu0 0.0
  %840 = vmatpush1.msra.mxu0 0.0
  %841 = vmatprep.subr.mxu0 0.0
  %842 = vmatpush1.msra.mxu0 0.0
  %843 = vmatprep.subr.mxu0 0.0
  %844 = vmatpush1.msra.mxu0 0.0
  %845 = vmatprep.subr.mxu0 0.0
  %846 = vmatpush1.msra.mxu0 0.0
  %847 = vmatprep.subr.mxu0 0.0
  %848 = vmatpush1.msra.mxu0 0.0
  %849 = vmatprep.subr.mxu0 0.0
  %850 = vmatpush1.msra.mxu0 0.0
  %851 = vmatprep.subr.mxu0 0.0
  %852 = vmatpush1.msra.mxu0 0.0
  %853 = vmatprep.mubr.f32.mxu0 0.0
  %854 = vmatmul.mubr.f32.gmra.mrb[0].mxu0 %v699
  %v855 = vpop.f32.mrb[0].mxu0
  %v856 = vadd.f32 %v81, %v855
  %v857 = vpop.f32.mrb[0].mxu0
  %858 = vmatprep.mubr.f32.mxu0 0.0
  %859 = vmatmul.mubr.f32.gmra.mrb[0].mxu0 %v700
  %v860 = vpop.f32.mrb[0].mxu0
  %v861 = vadd.f32 %v81, %v860
  %v862 = vpop.f32.mrb[0].mxu0
  %863 = vdwg.mxu0
  %v864 = vadd.f32 %v706, %v779
  %v865 = vadd.f32 %v709, %v785
  %v866 = vxor.u32 %v864, 2147483648
  %v867 = vxor.u32 %v865, 2147483648
  %v868 = vmul.f32 %v866, 1.442695
  %v869 = vpow.pop %v868
  %v870 = vmul.f32 %v867, 1.442695
  %v871 = vpow.pop %v870
  %v872 = vadd.f32 %v869, 1.0
  %v873 = vadd.f32 %v871, 1.0
  %v874 = vrcp.pop %v872
  %v875 = vmul.f32 1.0, %v874
  %v876 = vrcp.pop %v873
  %v877 = vmul.f32 1.0, %v876
  %v878 = vadd.f32 %v707, %v781
  %v879 = vadd.f32 %v710, %v787
  %v880 = vxor.u32 %v878, 2147483648
  %v881 = vxor.u32 %v879, 2147483648
  %v882 = vmul.f32 %v880, 1.442695
  %v883 = vpow.pop %v882
  %v884 = vmul.f32 %v881, 1.442695
  %v885 = vpow.pop %v884
  %v886 = vadd.f32 %v883, 1.0
  %v887 = vadd.f32 %v885, 1.0
  %v888 = vrcp.pop %v886
  %v889 = vmul.f32 1.0, %v888
  %v890 = vrcp.pop %v887
  %v891 = vmul.f32 1.0, %v890
  %v892 = vmul.f32 %v875, %v856
  %v893 = vmul.f32 %v877, %v861
  %v894 = vadd.f32 %v708, %v892
  %v895 = vadd.f32 %v711, %v893
  %v896 = vtanh.pop %v894
  %v897 = vtanh.pop %v895
  %v898 = vsub.f32 1.0, %v889
  %v899 = vsub.f32 1.0, %v891
  %v900 = vmul.f32 %v898, %v896
  %v901 = vmul.f32 %v899, %v897
  %v902 = vmul.f32 %v889, %v699
  %v903 = vmul.f32 %v891, %v700
  %v904 = vadd.f32 %v900, %v902
  %v905 = vadd.f32 %v901, %v903
  %s906 = scalar_lea.vmem %s0, 96
  %v907 = vld [vmem:[%s906] sm:$0xff]
  %v908 = vld [vmem:[%s906 + $0x8] sm:$0xf]
  %v909 = vld [vmem:[%s906 + $0xc] sm:$0xff]
  %v910 = vld [vmem:[%s906 + $0x14] sm:$0xf]
  %v911 = vunpack.c.l.bf16 %v907
  %v912 = vunpack.c.h.bf16 %v907
  %v913 = vunpack.c.l.bf16 %v908
  %v914 = vunpack.c.l.bf16 %v909
  %v915 = vunpack.c.h.bf16 %v909
  %v916 = vunpack.c.l.bf16 %v910
  %917 = vmatprep.subr.mxu0 %v21
  %918 = vmatpush1.msra.mxu0 %v20
  %919 = vmatprep.subr.mxu0 %v24
  %920 = vmatpush1.msra.mxu0 %v23
  %921 = vmatprep.subr.mxu0 %v27
  %922 = vmatpush1.msra.mxu0 %v26
  %923 = vmatprep.subr.mxu0 %v30
  %924 = vmatpush1.msra.mxu0 %v29
  %925 = vmatprep.subr.mxu0 %v33
  %926 = vmatpush1.msra.mxu0 %v32
  %927 = vmatprep.subr.mxu0 %v36
  %928 = vmatpush1.msra.mxu0 %v35
  %929 = vmatprep.subr.mxu0 %v39
  %930 = vmatpush1.msra.mxu0 %v38
  %931 = vmatprep.subr.mxu0 %v42
  %932 = vmatpush1.msra.mxu0 %v41
  %933 = vmatprep.subr.mxu0 %v45
  %934 = vmatpush1.msra.mxu0 %v44
  %935 = vmatprep.subr.mxu0 %v48
  %936 = vmatpush1.msra.mxu0 %v47
  %937 = vmatprep.subr.mxu0 %v51
  %938 = vmatpush1.msra.mxu0 %v50
  %939 = vmatprep.subr.mxu0 %v54
  %940 = vmatpush1.msra.mxu0 %v53
  %941 = vmatprep.subr.mxu0 %v57
  %942 = vmatpush1.msra.mxu0 %v56
  %943 = vmatprep.subr.mxu0 %v60
  %944 = vmatpush1.msra.mxu0 %v59
  %945 = vmatprep.subr.mxu0 %v63
  %946 = vmatpush1.msra.mxu0 %v62
  %947 = vmatprep.subr.mxu0 %v66
  %948 = vmatpush1.msra.mxu0 %v65
  %949 = vmatprep.subr.mxu0 0.0
  %950 = vmatpush1.msra.mxu0 0.0
  %951 = vmatprep.subr.mxu0 0.0
  %952 = vmatpush1.msra.mxu0 0.0
  %953 = vmatprep.subr.mxu0 0.0
  %954 = vmatpush1.msra.mxu0 0.0
  %955 = vmatprep.subr.mxu0 0.0
  %956 = vmatpush1.msra.mxu0 0.0
  %957 = vmatprep.subr.mxu0 0.0
  %958 = vmatpush1.msra.mxu0 0.0
  %959 = vmatprep.subr.mxu0 0.0
  %960 = vmatpush1.msra.mxu0 0.0
  %961 = vmatprep.subr.mxu0 0.0
  %962 = vmatpush1.msra.mxu0 0.0
  %963 = vmatprep.subr.mxu0 0.0
  %964 = vmatpush1.msra.mxu0 0.0
  %965 = vmatprep.subr.mxu0 0.0
  %966 = vmatpush1.msra.mxu0 0.0
  %967 = vmatprep.subr.mxu0 0.0
  %968 = vmatpush1.msra.mxu0 0.0
  %969 = vmatprep.subr.mxu0 0.0
  %970 = vmatpush1.msra.mxu0 0.0
  %971 = vmatprep.subr.mxu0 0.0
  %972 = vmatpush1.msra.mxu0 0.0
  %973 = vmatprep.subr.mxu0 0.0
  %974 = vmatpush1.msra.mxu0 0.0
  %975 = vmatprep.subr.mxu0 0.0
  %976 = vmatpush1.msra.mxu0 0.0
  %977 = vmatprep.subr.mxu0 0.0
  %978 = vmatpush1.msra.mxu0 0.0
  %979 = vmatprep.subr.mxu0 0.0
  %980 = vmatpush1.msra.mxu0 0.0
  %981 = vmatprep.mubr.f32.mxu0 0.0
  %982 = vmatmul.mubr.f32.gmra.mrb[0].mxu0 %v904
  %v983 = vpop.f32.mrb[0].mxu0
  %v984 = vadd.f32 %v73, %v983
  %v985 = vpop.f32.mrb[0].mxu0
  %v986 = vadd.f32 %v77, %v985
  %987 = vmatprep.mubr.f32.mxu0 0.0
  %988 = vmatmul.mubr.f32.gmra.mrb[0].mxu0 %v905
  %v989 = vpop.f32.mrb[0].mxu0
  %v990 = vadd.f32 %v73, %v989
  %v991 = vpop.f32.mrb[0].mxu0
  %v992 = vadd.f32 %v77, %v991
  %993 = vdwg.mxu0
  %994 = vmatprep.subr.mxu0 0.0
  %995 = vmatpush1.msra.mxu0 %v22
  %996 = vmatprep.subr.mxu0 0.0
  %997 = vmatpush1.msra.mxu0 %v25
  %998 = vmatprep.subr.mxu0 0.0
  %999 = vmatpush1.msra.mxu0 %v28
  %1000 = vmatprep.subr.mxu0 0.0
  %1001 = vmatpush1.msra.mxu0 %v31
  %1002 = vmatprep.subr.mxu0 0.0
  %1003 = vmatpush1.msra.mxu0 %v34
  %1004 = vmatprep.subr.mxu0 0.0
  %1005 = vmatpush1.msra.mxu0 %v37
  %1006 = vmatprep.subr.mxu0 0.0
  %1007 = vmatpush1.msra.mxu0 %v40
  %1008 = vmatprep.subr.mxu0 0.0
  %1009 = vmatpush1.msra.mxu0 %v43
  %1010 = vmatprep.subr.mxu0 0.0
  %1011 = vmatpush1.msra.mxu0 %v46
  %1012 = vmatprep.subr.mxu0 0.0
  %1013 = vmatpush1.msra.mxu0 %v49
  %1014 = vmatprep.subr.mxu0 0.0
  %1015 = vmatpush1.msra.mxu0 %v52
  %1016 = vmatprep.subr.mxu0 0.0
  %1017 = vmatpush1.msra.mxu0 %v55
  %1018 = vmatprep.subr.mxu0 0.0
  %1019 = vmatpush1.msra.mxu0 %v58
  %1020 = vmatprep.subr.mxu0 0.0
  %1021 = vmatpush1.msra.mxu0 %v61
  %1022 = vmatprep.subr.mxu0 0.0
  %1023 = vmatpush1.msra.mxu0 %v64
  %1024 = vmatprep.subr.mxu0 0.0
  %1025 = vmatpush1.msra.mxu0 %v67
  %1026 = vmatprep.subr.mxu0 0.0
  %1027 = vmatpush1.msra.mxu0 0.0
  %1028 = vmatprep.subr.mxu0 0.0
  %1029 = vmatpush1.msra.mxu0 0.0
  %1030 = vmatprep.subr.mxu0 0.0
  %1031 = vmatpush1.msra.mxu0 0.0
  %1032 = vmatprep.subr.mxu0 0.0
  %1033 = vmatpush1.msra.mxu0 0.0
  %1034 = vmatprep.subr.mxu0 0.0
  %1035 = vmatpush1.msra.mxu0 0.0
  %1036 = vmatprep.subr.mxu0 0.0
  %1037 = vmatpush1.msra.mxu0 0.0
  %1038 = vmatprep.subr.mxu0 0.0
  %1039 = vmatpush1.msra.mxu0 0.0
  %1040 = vmatprep.subr.mxu0 0.0
  %1041 = vmatpush1.msra.mxu0 0.0
  %1042 = vmatprep.subr.mxu0 0.0
  %1043 = vmatpush1.msra.mxu0 0.0
  %1044 = vmatprep.subr.mxu0 0.0
  %1045 = vmatpush1.msra.mxu0 0.0
  %1046 = vmatprep.subr.mxu0 0.0
  %1047 = vmatpush1.msra.mxu0 0.0
  %1048 = vmatprep.subr.mxu0 0.0
  %1049 = vmatpush1.msra.mxu0 0.0
  %1050 = vmatprep.subr.mxu0 0.0
  %1051 = vmatpush1.msra.mxu0 0.0
  %1052 = vmatprep.subr.mxu0 0.0
  %1053 = vmatpush1.msra.mxu0 0.0
  %1054 = vmatprep.subr.mxu0 0.0
  %1055 = vmatpush1.msra.mxu0 0.0
  %1056 = vmatprep.subr.mxu0 0.0
  %1057 = vmatpush1.msra.mxu0 0.0
  %1058 = vmatprep.mubr.f32.mxu0 0.0
  %1059 = vmatmul.mubr.f32.gmra.mrb[0].mxu0 %v904
  %v1060 = vpop.f32.mrb[0].mxu0
  %v1061 = vadd.f32 %v81, %v1060
  %v1062 = vpop.f32.mrb[0].mxu0
  %1063 = vmatprep.mubr.f32.mxu0 0.0
  %1064 = vmatmul.mubr.f32.gmra.mrb[0].mxu0 %v905
  %v1065 = vpop.f32.mrb[0].mxu0
  %v1066 = vadd.f32 %v81, %v1065
  %v1067 = vpop.f32.mrb[0].mxu0
  %1068 = vdwg.mxu0
  %v1069 = vadd.f32 %v911, %v984
  %v1070 = vadd.f32 %v914, %v990
  %v1071 = vxor.u32 %v1069, 2147483648
  %v1072 = vxor.u32 %v1070, 2147483648
  %v1073 = vmul.f32 %v1071, 1.442695
  %v1074 = vpow.pop %v1073
  %v1075 = vmul.f32 %v1072, 1.442695
  %v1076 = vpow.pop %v1075
  %v1077 = vadd.f32 %v1074, 1.0
  %v1078 = vadd.f32 %v1076, 1.0
  %v1079 = vrcp.pop %v1077
  %v1080 = vmul.f32 1.0, %v1079
  %v1081 = vrcp.pop %v1078
  %v1082 = vmul.f32 1.0, %v1081
  %v1083 = vadd.f32 %v912, %v986
  %v1084 = vadd.f32 %v915, %v992
  %v1085 = vxor.u32 %v1083, 2147483648
  %v1086 = vxor.u32 %v1084, 2147483648
  %v1087 = vmul.f32 %v1085, 1.442695
  %v1088 = vpow.pop %v1087
  %v1089 = vmul.f32 %v1086, 1.442695
  %v1090 = vpow.pop %v1089
  %v1091 = vadd.f32 %v1088, 1.0
  %v1092 = vadd.f32 %v1090, 1.0
  %v1093 = vrcp.pop %v1091
  %v1094 = vmul.f32 1.0, %v1093
  %v1095 = vrcp.pop %v1092
  %v1096 = vmul.f32 1.0, %v1095
  %v1097 = vmul.f32 %v1080, %v1061
  %v1098 = vmul.f32 %v1082, %v1066
  %v1099 = vadd.f32 %v913, %v1097
  %v1100 = vadd.f32 %v916, %v1098
  %v1101 = vtanh.pop %v1099
  %v1102 = vtanh.pop %v1100
  %v1103 = vsub.f32 1.0, %v1094
  %v1104 = vsub.f32 1.0, %v1096
  %v1105 = vmul.f32 %v1103, %v1101
  %v1106 = vmul.f32 %v1104, %v1102
  %v1107 = vmul.f32 %v1094, %v904
  %v1108 = vmul.f32 %v1096, %v905
  %v1109 = vadd.f32 %v1105, %v1107
  %v1110 = vadd.f32 %v1106, %v1108
  %s1111 = scalar_lea.vmem %s0, 120
  %v1112 = vld [vmem:[%s1111] sm:$0xff]
  %v1113 = vld [vmem:[%s1111 + $0x8] sm:$0xf]
  %v1114 = vld [vmem:[%s1111 + $0xc] sm:$0xff]
  %v1115 = vld [vmem:[%s1111 + $0x14] sm:$0xf]
  %v1116 = vunpack.c.l.bf16 %v1112
  %v1117 = vunpack.c.h.bf16 %v1112
  %v1118 = vunpack.c.l.bf16 %v1113
  %v1119 = vunpack.c.l.bf16 %v1114
  %v1120 = vunpack.c.h.bf16 %v1114
  %v1121 = vunpack.c.l.bf16 %v1115
  %1122 = vmatprep.subr.mxu0 %v21
  %1123 = vmatpush1.msra.mxu0 %v20
  %1124 = vmatprep.subr.mxu0 %v24
  %1125 = vmatpush1.msra.mxu0 %v23
  %1126 = vmatprep.subr.mxu0 %v27
  %1127 = vmatpush1.msra.mxu0 %v26
  %1128 = vmatprep.subr.mxu0 %v30
  %1129 = vmatpush1.msra.mxu0 %v29
  %1130 = vmatprep.subr.mxu0 %v33
  %1131 = vmatpush1.msra.mxu0 %v32
  %1132 = vmatprep.subr.mxu0 %v36
  %1133 = vmatpush1.msra.mxu0 %v35
  %1134 = vmatprep.subr.mxu0 %v39
  %1135 = vmatpush1.msra.mxu0 %v38
  %1136 = vmatprep.subr.mxu0 %v42
  %1137 = vmatpush1.msra.mxu0 %v41
  %1138 = vmatprep.subr.mxu0 %v45
  %1139 = vmatpush1.msra.mxu0 %v44
  %1140 = vmatprep.subr.mxu0 %v48
  %1141 = vmatpush1.msra.mxu0 %v47
  %1142 = vmatprep.subr.mxu0 %v51
  %1143 = vmatpush1.msra.mxu0 %v50
  %1144 = vmatprep.subr.mxu0 %v54
  %1145 = vmatpush1.msra.mxu0 %v53
  %1146 = vmatprep.subr.mxu0 %v57
  %1147 = vmatpush1.msra.mxu0 %v56
  %1148 = vmatprep.subr.mxu0 %v60
  %1149 = vmatpush1.msra.mxu0 %v59
  %1150 = vmatprep.subr.mxu0 %v63
  %1151 = vmatpush1.msra.mxu0 %v62
  %1152 = vmatprep.subr.mxu0 %v66
  %1153 = vmatpush1.msra.mxu0 %v65
  %1154 = vmatprep.subr.mxu0 0.0
  %1155 = vmatpush1.msra.mxu0 0.0
  %1156 = vmatprep.subr.mxu0 0.0
  %1157 = vmatpush1.msra.mxu0 0.0
  %1158 = vmatprep.subr.mxu0 0.0
  %1159 = vmatpush1.msra.mxu0 0.0
  %1160 = vmatprep.subr.mxu0 0.0
  %1161 = vmatpush1.msra.mxu0 0.0
  %1162 = vmatprep.subr.mxu0 0.0
  %1163 = vmatpush1.msra.mxu0 0.0
  %1164 = vmatprep.subr.mxu0 0.0
  %1165 = vmatpush1.msra.mxu0 0.0
  %1166 = vmatprep.subr.mxu0 0.0
  %1167 = vmatpush1.msra.mxu0 0.0
  %1168 = vmatprep.subr.mxu0 0.0
  %1169 = vmatpush1.msra.mxu0 0.0
  %1170 = vmatprep.subr.mxu0 0.0
  %1171 = vmatpush1.msra.mxu0 0.0
  %1172 = vmatprep.subr.mxu0 0.0
  %1173 = vmatpush1.msra.mxu0 0.0
  %1174 = vmatprep.subr.mxu0 0.0
  %1175 = vmatpush1.msra.mxu0 0.0
  %1176 = vmatprep.subr.mxu0 0.0
  %1177 = vmatpush1.msra.mxu0 0.0
  %1178 = vmatprep.subr.mxu0 0.0
  %1179 = vmatpush1.msra.mxu0 0.0
  %1180 = vmatprep.subr.mxu0 0.0
  %1181 = vmatpush1.msra.mxu0 0.0
  %1182 = vmatprep.subr.mxu0 0.0
  %1183 = vmatpush1.msra.mxu0 0.0
  %1184 = vmatprep.subr.mxu0 0.0
  %1185 = vmatpush1.msra.mxu0 0.0
  %1186 = vmatprep.mubr.f32.mxu0 0.0
  %1187 = vmatmul.mubr.f32.gmra.mrb[0].mxu0 %v1109
  %v1188 = vpop.f32.mrb[0].mxu0
  %v1189 = vadd.f32 %v73, %v1188
  %v1190 = vpop.f32.mrb[0].mxu0
  %v1191 = vadd.f32 %v77, %v1190
  %1192 = vmatprep.mubr.f32.mxu0 0.0
  %1193 = vmatmul.mubr.f32.gmra.mrb[0].mxu0 %v1110
  %v1194 = vpop.f32.mrb[0].mxu0
  %v1195 = vadd.f32 %v73, %v1194
  %v1196 = vpop.f32.mrb[0].mxu0
  %v1197 = vadd.f32 %v77, %v1196
  %1198 = vdwg.mxu0
  %1199 = vmatprep.subr.mxu0 0.0
  %1200 = vmatpush1.msra.mxu0 %v22
  %1201 = vmatprep.subr.mxu0 0.0
  %1202 = vmatpush1.msra.mxu0 %v25
  %1203 = vmatprep.subr.mxu0 0.0
  %1204 = vmatpush1.msra.mxu0 %v28
  %1205 = vmatprep.subr.mxu0 0.0
  %1206 = vmatpush1.msra.mxu0 %v31
  %1207 = vmatprep.subr.mxu0 0.0
  %1208 = vmatpush1.msra.mxu0 %v34
  %1209 = vmatprep.subr.mxu0 0.0
  %1210 = vmatpush1.msra.mxu0 %v37
  %1211 = vmatprep.subr.mxu0 0.0
  %1212 = vmatpush1.msra.mxu0 %v40
  %1213 = vmatprep.subr.mxu0 0.0
  %1214 = vmatpush1.msra.mxu0 %v43
  %1215 = vmatprep.subr.mxu0 0.0
  %1216 = vmatpush1.msra.mxu0 %v46
  %1217 = vmatprep.subr.mxu0 0.0
  %1218 = vmatpush1.msra.mxu0 %v49
  %1219 = vmatprep.subr.mxu0 0.0
  %1220 = vmatpush1.msra.mxu0 %v52
  %1221 = vmatprep.subr.mxu0 0.0
  %1222 = vmatpush1.msra.mxu0 %v55
  %1223 = vmatprep.subr.mxu0 0.0
  %1224 = vmatpush1.msra.mxu0 %v58
  %1225 = vmatprep.subr.mxu0 0.0
  %1226 = vmatpush1.msra.mxu0 %v61
  %1227 = vmatprep.subr.mxu0 0.0
  %1228 = vmatpush1.msra.mxu0 %v64
  %1229 = vmatprep.subr.mxu0 0.0
  %1230 = vmatpush1.msra.mxu0 %v67
  %1231 = vmatprep.subr.mxu0 0.0
  %1232 = vmatpush1.msra.mxu0 0.0
  %1233 = vmatprep.subr.mxu0 0.0
  %1234 = vmatpush1.msra.mxu0 0.0
  %1235 = vmatprep.subr.mxu0 0.0
  %1236 = vmatpush1.msra.mxu0 0.0
  %1237 = vmatprep.subr.mxu0 0.0
  %1238 = vmatpush1.msra.mxu0 0.0
  %1239 = vmatprep.subr.mxu0 0.0
  %1240 = vmatpush1.msra.mxu0 0.0
  %1241 = vmatprep.subr.mxu0 0.0
  %1242 = vmatpush1.msra.mxu0 0.0
  %1243 = vmatprep.subr.mxu0 0.0
  %1244 = vmatpush1.msra.mxu0 0.0
  %1245 = vmatprep.subr.mxu0 0.0
  %1246 = vmatpush1.msra.mxu0 0.0
  %1247 = vmatprep.subr.mxu0 0.0
  %1248 = vmatpush1.msra.mxu0 0.0
  %1249 = vmatprep.subr.mxu0 0.0
  %1250 = vmatpush1.msra.mxu0 0.0
  %1251 = vmatprep.subr.mxu0 0.0
  %1252 = vmatpush1.msra.mxu0 0.0
  %1253 = vmatprep.subr.mxu0 0.0
  %1254 = vmatpush1.msra.mxu0 0.0
  %1255 = vmatprep.subr.mxu0 0.0
  %1256 = vmatpush1.msra.mxu0 0.0
  %1257 = vmatprep.subr.mxu0 0.0
  %1258 = vmatpush1.msra.mxu0 0.0
  %1259 = vmatprep.subr.mxu0 0.0
  %1260 = vmatpush1.msra.mxu0 0.0
  %1261 = vmatprep.subr.mxu0 0.0
  %1262 = vmatpush1.msra.mxu0 0.0
  %1263 = vmatprep.mubr.f32.mxu0 0.0
  %1264 = vmatmul.mubr.f32.gmra.mrb[0].mxu0 %v1109
  %v1265 = vpop.f32.mrb[0].mxu0
  %v1266 = vadd.f32 %v81, %v1265
  %v1267 = vpop.f32.mrb[0].mxu0
  %1268 = vmatprep.mubr.f32.mxu0 0.0
  %1269 = vmatmul.mubr.f32.gmra.mrb[0].mxu0 %v1110
  %v1270 = vpop.f32.mrb[0].mxu0
  %v1271 = vadd.f32 %v81, %v1270
  %v1272 = vpop.f32.mrb[0].mxu0
  %1273 = vdwg.mxu0
  %v1274 = vadd.f32 %v1116, %v1189
  %v1275 = vadd.f32 %v1119, %v1195
  %v1276 = vxor.u32 %v1274, 2147483648
  %v1277 = vxor.u32 %v1275, 2147483648
  %v1278 = vmul.f32 %v1276, 1.442695
  %v1279 = vpow.pop %v1278
  %v1280 = vmul.f32 %v1277, 1.442695
  %v1281 = vpow.pop %v1280
  %v1282 = vadd.f32 %v1279, 1.0
  %v1283 = vadd.f32 %v1281, 1.0
  %v1284 = vrcp.pop %v1282
  %v1285 = vmul.f32 1.0, %v1284
  %v1286 = vrcp.pop %v1283
  %v1287 = vmul.f32 1.0, %v1286
  %v1288 = vadd.f32 %v1117, %v1191
  %v1289 = vadd.f32 %v1120, %v1197
  %v1290 = vxor.u32 %v1288, 2147483648
  %v1291 = vxor.u32 %v1289, 2147483648
  %v1292 = vmul.f32 %v1290, 1.442695
  %v1293 = vpow.pop %v1292
  %v1294 = vmul.f32 %v1291, 1.442695
  %v1295 = vpow.pop %v1294
  %v1296 = vadd.f32 %v1293, 1.0
  %v1297 = vadd.f32 %v1295, 1.0
  %v1298 = vrcp.pop %v1296
  %v1299 = vmul.f32 1.0, %v1298
  %v1300 = vrcp.pop %v1297
  %v1301 = vmul.f32 1.0, %v1300
  %v1302 = vmul.f32 %v1285, %v1266
  %v1303 = vmul.f32 %v1287, %v1271
  %v1304 = vadd.f32 %v1118, %v1302
  %v1305 = vadd.f32 %v1121, %v1303
  %v1306 = vtanh.pop %v1304
  %v1307 = vtanh.pop %v1305
  %v1308 = vsub.f32 1.0, %v1299
  %v1309 = vsub.f32 1.0, %v1301
  %v1310 = vmul.f32 %v1308, %v1306
  %v1311 = vmul.f32 %v1309, %v1307
  %v1312 = vmul.f32 %v1299, %v1109
  %v1313 = vmul.f32 %v1301, %v1110
  %v1314 = vadd.f32 %v1310, %v1312
  %v1315 = vadd.f32 %v1311, %v1313
  %s1316 = scalar_lea.vmem %s0, 144
  %v1317 = vld [vmem:[%s1316] sm:$0xff]
  %v1318 = vld [vmem:[%s1316 + $0x8] sm:$0xf]
  %v1319 = vld [vmem:[%s1316 + $0xc] sm:$0xff]
  %v1320 = vld [vmem:[%s1316 + $0x14] sm:$0xf]
  %v1321 = vunpack.c.l.bf16 %v1317
  %v1322 = vunpack.c.h.bf16 %v1317
  %v1323 = vunpack.c.l.bf16 %v1318
  %v1324 = vunpack.c.l.bf16 %v1319
  %v1325 = vunpack.c.h.bf16 %v1319
  %v1326 = vunpack.c.l.bf16 %v1320
  %1327 = vmatprep.subr.mxu0 %v21
  %1328 = vmatpush1.msra.mxu0 %v20
  %1329 = vmatprep.subr.mxu0 %v24
  %1330 = vmatpush1.msra.mxu0 %v23
  %1331 = vmatprep.subr.mxu0 %v27
  %1332 = vmatpush1.msra.mxu0 %v26
  %1333 = vmatprep.subr.mxu0 %v30
  %1334 = vmatpush1.msra.mxu0 %v29
  %1335 = vmatprep.subr.mxu0 %v33
  %1336 = vmatpush1.msra.mxu0 %v32
  %1337 = vmatprep.subr.mxu0 %v36
  %1338 = vmatpush1.msra.mxu0 %v35
  %1339 = vmatprep.subr.mxu0 %v39
  %1340 = vmatpush1.msra.mxu0 %v38
  %1341 = vmatprep.subr.mxu0 %v42
  %1342 = vmatpush1.msra.mxu0 %v41
  %1343 = vmatprep.subr.mxu0 %v45
  %1344 = vmatpush1.msra.mxu0 %v44
  %1345 = vmatprep.subr.mxu0 %v48
  %1346 = vmatpush1.msra.mxu0 %v47
  %1347 = vmatprep.subr.mxu0 %v51
  %1348 = vmatpush1.msra.mxu0 %v50
  %1349 = vmatprep.subr.mxu0 %v54
  %1350 = vmatpush1.msra.mxu0 %v53
  %1351 = vmatprep.subr.mxu0 %v57
  %1352 = vmatpush1.msra.mxu0 %v56
  %1353 = vmatprep.subr.mxu0 %v60
  %1354 = vmatpush1.msra.mxu0 %v59
  %1355 = vmatprep.subr.mxu0 %v63
  %1356 = vmatpush1.msra.mxu0 %v62
  %1357 = vmatprep.subr.mxu0 %v66
  %1358 = vmatpush1.msra.mxu0 %v65
  %1359 = vmatprep.subr.mxu0 0.0
  %1360 = vmatpush1.msra.mxu0 0.0
  %1361 = vmatprep.subr.mxu0 0.0
  %1362 = vmatpush1.msra.mxu0 0.0
  %1363 = vmatprep.subr.mxu0 0.0
  %1364 = vmatpush1.msra.mxu0 0.0
  %1365 = vmatprep.subr.mxu0 0.0
  %1366 = vmatpush1.msra.mxu0 0.0
  %1367 = vmatprep.subr.mxu0 0.0
  %1368 = vmatpush1.msra.mxu0 0.0
  %1369 = vmatprep.subr.mxu0 0.0
  %1370 = vmatpush1.msra.mxu0 0.0
  %1371 = vmatprep.subr.mxu0 0.0
  %1372 = vmatpush1.msra.mxu0 0.0
  %1373 = vmatprep.subr.mxu0 0.0
  %1374 = vmatpush1.msra.mxu0 0.0
  %1375 = vmatprep.subr.mxu0 0.0
  %1376 = vmatpush1.msra.mxu0 0.0
  %1377 = vmatprep.subr.mxu0 0.0
  %1378 = vmatpush1.msra.mxu0 0.0
  %1379 = vmatprep.subr.mxu0 0.0
  %1380 = vmatpush1.msra.mxu0 0.0
  %1381 = vmatprep.subr.mxu0 0.0
  %1382 = vmatpush1.msra.mxu0 0.0
  %1383 = vmatprep.subr.mxu0 0.0
  %1384 = vmatpush1.msra.mxu0 0.0
  %1385 = vmatprep.subr.mxu0 0.0
  %1386 = vmatpush1.msra.mxu0 0.0
  %1387 = vmatprep.subr.mxu0 0.0
  %1388 = vmatpush1.msra.mxu0 0.0
  %1389 = vmatprep.subr.mxu0 0.0
  %1390 = vmatpush1.msra.mxu0 0.0
  %1391 = vmatprep.mubr.f32.mxu0 0.0
  %1392 = vmatmul.mubr.f32.gmra.mrb[0].mxu0 %v1314
  %v1393 = vpop.f32.mrb[0].mxu0
  %v1394 = vadd.f32 %v73, %v1393
  %v1395 = vpop.f32.mrb[0].mxu0
  %v1396 = vadd.f32 %v77, %v1395
  %1397 = vmatprep.mubr.f32.mxu0 0.0
  %1398 = vmatmul.mubr.f32.gmra.mrb[0].mxu0 %v1315
  %v1399 = vpop.f32.mrb[0].mxu0
  %v1400 = vadd.f32 %v73, %v1399
  %v1401 = vpop.f32.mrb[0].mxu0
  %v1402 = vadd.f32 %v77, %v1401
  %1403 = vdwg.mxu0
  %1404 = vmatprep.subr.mxu0 0.0
  %1405 = vmatpush1.msra.mxu0 %v22
  %1406 = vmatprep.subr.mxu0 0.0
  %1407 = vmatpush1.msra.mxu0 %v25
  %1408 = vmatprep.subr.mxu0 0.0
  %1409 = vmatpush1.msra.mxu0 %v28
  %1410 = vmatprep.subr.mxu0 0.0
  %1411 = vmatpush1.msra.mxu0 %v31
  %1412 = vmatprep.subr.mxu0 0.0
  %1413 = vmatpush1.msra.mxu0 %v34
  %1414 = vmatprep.subr.mxu0 0.0
  %1415 = vmatpush1.msra.mxu0 %v37
  %1416 = vmatprep.subr.mxu0 0.0
  %1417 = vmatpush1.msra.mxu0 %v40
  %1418 = vmatprep.subr.mxu0 0.0
  %1419 = vmatpush1.msra.mxu0 %v43
  %1420 = vmatprep.subr.mxu0 0.0
  %1421 = vmatpush1.msra.mxu0 %v46
  %1422 = vmatprep.subr.mxu0 0.0
  %1423 = vmatpush1.msra.mxu0 %v49
  %1424 = vmatprep.subr.mxu0 0.0
  %1425 = vmatpush1.msra.mxu0 %v52
  %1426 = vmatprep.subr.mxu0 0.0
  %1427 = vmatpush1.msra.mxu0 %v55
  %1428 = vmatprep.subr.mxu0 0.0
  %1429 = vmatpush1.msra.mxu0 %v58
  %1430 = vmatprep.subr.mxu0 0.0
  %1431 = vmatpush1.msra.mxu0 %v61
  %1432 = vmatprep.subr.mxu0 0.0
  %1433 = vmatpush1.msra.mxu0 %v64
  %1434 = vmatprep.subr.mxu0 0.0
  %1435 = vmatpush1.msra.mxu0 %v67
  %1436 = vmatprep.subr.mxu0 0.0
  %1437 = vmatpush1.msra.mxu0 0.0
  %1438 = vmatprep.subr.mxu0 0.0
  %1439 = vmatpush1.msra.mxu0 0.0
  %1440 = vmatprep.subr.mxu0 0.0
  %1441 = vmatpush1.msra.mxu0 0.0
  %1442 = vmatprep.subr.mxu0 0.0
  %1443 = vmatpush1.msra.mxu0 0.0
  %1444 = vmatprep.subr.mxu0 0.0
  %1445 = vmatpush1.msra.mxu0 0.0
  %1446 = vmatprep.subr.mxu0 0.0
  %1447 = vmatpush1.msra.mxu0 0.0
  %1448 = vmatprep.subr.mxu0 0.0
  %1449 = vmatpush1.msra.mxu0 0.0
  %1450 = vmatprep.subr.mxu0 0.0
  %1451 = vmatpush1.msra.mxu0 0.0
  %1452 = vmatprep.subr.mxu0 0.0
  %1453 = vmatpush1.msra.mxu0 0.0
  %1454 = vmatprep.subr.mxu0 0.0
  %1455 = vmatpush1.msra.mxu0 0.0
  %1456 = vmatprep.subr.mxu0 0.0
  %1457 = vmatpush1.msra.mxu0 0.0
  %1458 = vmatprep.subr.mxu0 0.0
  %1459 = vmatpush1.msra.mxu0 0.0
  %1460 = vmatprep.subr.mxu0 0.0
  %1461 = vmatpush1.msra.mxu0 0.0
  %1462 = vmatprep.subr.mxu0 0.0
  %1463 = vmatpush1.msra.mxu0 0.0
  %1464 = vmatprep.subr.mxu0 0.0
  %1465 = vmatpush1.msra.mxu0 0.0
  %1466 = vmatprep.subr.mxu0 0.0
  %1467 = vmatpush1.msra.mxu0 0.0
  %1468 = vmatprep.mubr.f32.mxu0 0.0
  %1469 = vmatmul.mubr.f32.gmra.mrb[0].mxu0 %v1314
  %v1470 = vpop.f32.mrb[0].mxu0
  %v1471 = vadd.f32 %v81, %v1470
  %v1472 = vpop.f32.mrb[0].mxu0
  %1473 = vmatprep.mubr.f32.mxu0 0.0
  %1474 = vmatmul.mubr.f32.gmra.mrb[0].mxu0 %v1315
  %v1475 = vpop.f32.mrb[0].mxu0
  %v1476 = vadd.f32 %v81, %v1475
  %v1477 = vpop.f32.mrb[0].mxu0
  %1478 = vdwg.mxu0
  %v1479 = vadd.f32 %v1321, %v1394
  %v1480 = vadd.f32 %v1324, %v1400
  %v1481 = vxor.u32 %v1479, 2147483648
  %v1482 = vxor.u32 %v1480, 2147483648
  %v1483 = vmul.f32 %v1481, 1.442695
  %v1484 = vpow.pop %v1483
  %v1485 = vmul.f32 %v1482, 1.442695
  %v1486 = vpow.pop %v1485
  %v1487 = vadd.f32 %v1484, 1.0
  %v1488 = vadd.f32 %v1486, 1.0
  %v1489 = vrcp.pop %v1487
  %v1490 = vmul.f32 1.0, %v1489
  %v1491 = vrcp.pop %v1488
  %v1492 = vmul.f32 1.0, %v1491
  %v1493 = vadd.f32 %v1322, %v1396
  %v1494 = vadd.f32 %v1325, %v1402
  %v1495 = vxor.u32 %v1493, 2147483648
  %v1496 = vxor.u32 %v1494, 2147483648
  %v1497 = vmul.f32 %v1495, 1.442695
  %v1498 = vpow.pop %v1497
  %v1499 = vmul.f32 %v1496, 1.442695
  %v1500 = vpow.pop %v1499
  %v1501 = vadd.f32 %v1498, 1.0
  %v1502 = vadd.f32 %v1500, 1.0
  %v1503 = vrcp.pop %v1501
  %v1504 = vmul.f32 1.0, %v1503
  %v1505 = vrcp.pop %v1502
  %v1506 = vmul.f32 1.0, %v1505
  %v1507 = vmul.f32 %v1490, %v1471
  %v1508 = vmul.f32 %v1492, %v1476
  %v1509 = vadd.f32 %v1323, %v1507
  %v1510 = vadd.f32 %v1326, %v1508
  %v1511 = vtanh.pop %v1509
  %v1512 = vtanh.pop %v1510
  %v1513 = vsub.f32 1.0, %v1504
  %v1514 = vsub.f32 1.0, %v1506
  %v1515 = vmul.f32 %v1513, %v1511
  %v1516 = vmul.f32 %v1514, %v1512
  %v1517 = vmul.f32 %v1504, %v1314
  %v1518 = vmul.f32 %v1506, %v1315
  %v1519 = vadd.f32 %v1515, %v1517
  %v1520 = vadd.f32 %v1516, %v1518
  %s1521 = scalar_lea.vmem %s0, 168
  %v1522 = vld [vmem:[%s1521] sm:$0xff]
  %v1523 = vld [vmem:[%s1521 + $0x8] sm:$0xf]
  %v1524 = vld [vmem:[%s1521 + $0xc] sm:$0xff]
  %v1525 = vld [vmem:[%s1521 + $0x14] sm:$0xf]
  %v1526 = vunpack.c.l.bf16 %v1522
  %v1527 = vunpack.c.h.bf16 %v1522
  %v1528 = vunpack.c.l.bf16 %v1523
  %v1529 = vunpack.c.l.bf16 %v1524
  %v1530 = vunpack.c.h.bf16 %v1524
  %v1531 = vunpack.c.l.bf16 %v1525
  %1532 = vmatprep.subr.mxu0 %v21
  %1533 = vmatpush1.msra.mxu0 %v20
  %1534 = vmatprep.subr.mxu0 %v24
  %1535 = vmatpush1.msra.mxu0 %v23
  %1536 = vmatprep.subr.mxu0 %v27
  %1537 = vmatpush1.msra.mxu0 %v26
  %1538 = vmatprep.subr.mxu0 %v30
  %1539 = vmatpush1.msra.mxu0 %v29
  %1540 = vmatprep.subr.mxu0 %v33
  %1541 = vmatpush1.msra.mxu0 %v32
  %1542 = vmatprep.subr.mxu0 %v36
  %1543 = vmatpush1.msra.mxu0 %v35
  %1544 = vmatprep.subr.mxu0 %v39
  %1545 = vmatpush1.msra.mxu0 %v38
  %1546 = vmatprep.subr.mxu0 %v42
  %1547 = vmatpush1.msra.mxu0 %v41
  %1548 = vmatprep.subr.mxu0 %v45
  %1549 = vmatpush1.msra.mxu0 %v44
  %1550 = vmatprep.subr.mxu0 %v48
  %1551 = vmatpush1.msra.mxu0 %v47
  %1552 = vmatprep.subr.mxu0 %v51
  %1553 = vmatpush1.msra.mxu0 %v50
  %1554 = vmatprep.subr.mxu0 %v54
  %1555 = vmatpush1.msra.mxu0 %v53
  %1556 = vmatprep.subr.mxu0 %v57
  %1557 = vmatpush1.msra.mxu0 %v56
  %1558 = vmatprep.subr.mxu0 %v60
  %1559 = vmatpush1.msra.mxu0 %v59
  %1560 = vmatprep.subr.mxu0 %v63
  %1561 = vmatpush1.msra.mxu0 %v62
  %1562 = vmatprep.subr.mxu0 %v66
  %1563 = vmatpush1.msra.mxu0 %v65
  %1564 = vmatprep.subr.mxu0 0.0
  %1565 = vmatpush1.msra.mxu0 0.0
  %1566 = vmatprep.subr.mxu0 0.0
  %1567 = vmatpush1.msra.mxu0 0.0
  %1568 = vmatprep.subr.mxu0 0.0
  %1569 = vmatpush1.msra.mxu0 0.0
  %1570 = vmatprep.subr.mxu0 0.0
  %1571 = vmatpush1.msra.mxu0 0.0
  %1572 = vmatprep.subr.mxu0 0.0
  %1573 = vmatpush1.msra.mxu0 0.0
  %1574 = vmatprep.subr.mxu0 0.0
  %1575 = vmatpush1.msra.mxu0 0.0
  %1576 = vmatprep.subr.mxu0 0.0
  %1577 = vmatpush1.msra.mxu0 0.0
  %1578 = vmatprep.subr.mxu0 0.0
  %1579 = vmatpush1.msra.mxu0 0.0
  %1580 = vmatprep.subr.mxu0 0.0
  %1581 = vmatpush1.msra.mxu0 0.0
  %1582 = vmatprep.subr.mxu0 0.0
  %1583 = vmatpush1.msra.mxu0 0.0
  %1584 = vmatprep.subr.mxu0 0.0
  %1585 = vmatpush1.msra.mxu0 0.0
  %1586 = vmatprep.subr.mxu0 0.0
  %1587 = vmatpush1.msra.mxu0 0.0
  %1588 = vmatprep.subr.mxu0 0.0
  %1589 = vmatpush1.msra.mxu0 0.0
  %1590 = vmatprep.subr.mxu0 0.0
  %1591 = vmatpush1.msra.mxu0 0.0
  %1592 = vmatprep.subr.mxu0 0.0
  %1593 = vmatpush1.msra.mxu0 0.0
  %1594 = vmatprep.subr.mxu0 0.0
  %1595 = vmatpush1.msra.mxu0 0.0
  %1596 = vmatprep.mubr.f32.mxu0 0.0
  %1597 = vmatmul.mubr.f32.gmra.mrb[0].mxu0 %v1519
  %v1598 = vpop.f32.mrb[0].mxu0
  %v1599 = vadd.f32 %v73, %v1598
  %v1600 = vpop.f32.mrb[0].mxu0
  %v1601 = vadd.f32 %v77, %v1600
  %1602 = vmatprep.mubr.f32.mxu0 0.0
  %1603 = vmatmul.mubr.f32.gmra.mrb[0].mxu0 %v1520
  %v1604 = vpop.f32.mrb[0].mxu0
  %v1605 = vadd.f32 %v73, %v1604
  %v1606 = vpop.f32.mrb[0].mxu0
  %v1607 = vadd.f32 %v77, %v1606
  %1608 = vdwg.mxu0
  %1609 = vmatprep.subr.mxu0 0.0
  %1610 = vmatpush1.msra.mxu0 %v22
  %1611 = vmatprep.subr.mxu0 0.0
  %1612 = vmatpush1.msra.mxu0 %v25
  %1613 = vmatprep.subr.mxu0 0.0
  %1614 = vmatpush1.msra.mxu0 %v28
  %1615 = vmatprep.subr.mxu0 0.0
  %1616 = vmatpush1.msra.mxu0 %v31
  %1617 = vmatprep.subr.mxu0 0.0
  %1618 = vmatpush1.msra.mxu0 %v34
  %1619 = vmatprep.subr.mxu0 0.0
  %1620 = vmatpush1.msra.mxu0 %v37
  %1621 = vmatprep.subr.mxu0 0.0
  %1622 = vmatpush1.msra.mxu0 %v40
  %1623 = vmatprep.subr.mxu0 0.0
  %1624 = vmatpush1.msra.mxu0 %v43
  %1625 = vmatprep.subr.mxu0 0.0
  %1626 = vmatpush1.msra.mxu0 %v46
  %1627 = vmatprep.subr.mxu0 0.0
  %1628 = vmatpush1.msra.mxu0 %v49
  %1629 = vmatprep.subr.mxu0 0.0
  %1630 = vmatpush1.msra.mxu0 %v52
  %1631 = vmatprep.subr.mxu0 0.0
  %1632 = vmatpush1.msra.mxu0 %v55
  %1633 = vmatprep.subr.mxu0 0.0
  %1634 = vmatpush1.msra.mxu0 %v58
  %1635 = vmatprep.subr.mxu0 0.0
  %1636 = vmatpush1.msra.mxu0 %v61
  %1637 = vmatprep.subr.mxu0 0.0
  %1638 = vmatpush1.msra.mxu0 %v64
  %1639 = vmatprep.subr.mxu0 0.0
  %1640 = vmatpush1.msra.mxu0 %v67
  %1641 = vmatprep.subr.mxu0 0.0
  %1642 = vmatpush1.msra.mxu0 0.0
  %1643 = vmatprep.subr.mxu0 0.0
  %1644 = vmatpush1.msra.mxu0 0.0
  %1645 = vmatprep.subr.mxu0 0.0
  %1646 = vmatpush1.msra.mxu0 0.0
  %1647 = vmatprep.subr.mxu0 0.0
  %1648 = vmatpush1.msra.mxu0 0.0
  %1649 = vmatprep.subr.mxu0 0.0
  %1650 = vmatpush1.msra.mxu0 0.0
  %1651 = vmatprep.subr.mxu0 0.0
  %1652 = vmatpush1.msra.mxu0 0.0
  %1653 = vmatprep.subr.mxu0 0.0
  %1654 = vmatpush1.msra.mxu0 0.0
  %1655 = vmatprep.subr.mxu0 0.0
  %1656 = vmatpush1.msra.mxu0 0.0
  %1657 = vmatprep.subr.mxu0 0.0
  %1658 = vmatpush1.msra.mxu0 0.0
  %1659 = vmatprep.subr.mxu0 0.0
  %1660 = vmatpush1.msra.mxu0 0.0
  %1661 = vmatprep.subr.mxu0 0.0
  %1662 = vmatpush1.msra.mxu0 0.0
  %1663 = vmatprep.subr.mxu0 0.0
  %1664 = vmatpush1.msra.mxu0 0.0
  %1665 = vmatprep.subr.mxu0 0.0
  %1666 = vmatpush1.msra.mxu0 0.0
  %1667 = vmatprep.subr.mxu0 0.0
  %1668 = vmatpush1.msra.mxu0 0.0
  %1669 = vmatprep.subr.mxu0 0.0
  %1670 = vmatpush1.msra.mxu0 0.0
  %1671 = vmatprep.subr.mxu0 0.0
  %1672 = vmatpush1.msra.mxu0 0.0
  %1673 = vmatprep.mubr.f32.mxu0 0.0
  %1674 = vmatmul.mubr.f32.gmra.mrb[0].mxu0 %v1519
  %v1675 = vpop.f32.mrb[0].mxu0
  %v1676 = vadd.f32 %v81, %v1675
  %v1677 = vpop.f32.mrb[0].mxu0
  %1678 = vmatprep.mubr.f32.mxu0 0.0
  %1679 = vmatmul.mubr.f32.gmra.mrb[0].mxu0 %v1520
  %v1680 = vpop.f32.mrb[0].mxu0
  %v1681 = vadd.f32 %v81, %v1680
  %v1682 = vpop.f32.mrb[0].mxu0
  %1683 = vdwg.mxu0
  %v1684 = vadd.f32 %v1526, %v1599
  %v1685 = vadd.f32 %v1529, %v1605
  %v1686 = vxor.u32 %v1684, 2147483648
  %v1687 = vxor.u32 %v1685, 2147483648
  %v1688 = vmul.f32 %v1686, 1.442695
  %v1689 = vpow.pop %v1688
  %v1690 = vmul.f32 %v1687, 1.442695
  %v1691 = vpow.pop %v1690
  %v1692 = vadd.f32 %v1689, 1.0
  %v1693 = vadd.f32 %v1691, 1.0
  %v1694 = vrcp.pop %v1692
  %v1695 = vmul.f32 1.0, %v1694
  %v1696 = vrcp.pop %v1693
  %v1697 = vmul.f32 1.0, %v1696
  %v1698 = vadd.f32 %v1527, %v1601
  %v1699 = vadd.f32 %v1530, %v1607
  %v1700 = vxor.u32 %v1698, 2147483648
  %v1701 = vxor.u32 %v1699, 2147483648
  %v1702 = vmul.f32 %v1700, 1.442695
  %v1703 = vpow.pop %v1702
  %v1704 = vmul.f32 %v1701, 1.442695
  %v1705 = vpow.pop %v1704
  %v1706 = vadd.f32 %v1703, 1.0
  %v1707 = vadd.f32 %v1705, 1.0
  %v1708 = vrcp.pop %v1706
  %v1709 = vmul.f32 1.0, %v1708
  %v1710 = vrcp.pop %v1707
  %v1711 = vmul.f32 1.0, %v1710
  %v1712 = vmul.f32 %v1695, %v1676
  %v1713 = vmul.f32 %v1697, %v1681
  %v1714 = vadd.f32 %v1528, %v1712
  %v1715 = vadd.f32 %v1531, %v1713
  %v1716 = vtanh.pop %v1714
  %v1717 = vtanh.pop %v1715
  %v1718 = vsub.f32 1.0, %v1709
  %v1719 = vsub.f32 1.0, %v1711
  %v1720 = vmul.f32 %v1718, %v1716
  %v1721 = vmul.f32 %v1719, %v1717
  %v1722 = vmul.f32 %v1709, %v1519
  %v1723 = vmul.f32 %v1711, %v1520
  %v1724 = vadd.f32 %v1720, %v1722
  %v1725 = vadd.f32 %v1721, %v1723
  %1726 = vst [vmem:[#allocation2] sm:$0xff] %v1724
  %1727 = vst [vmem:[#allocation2 + $0x8] sm:$0xff] %v1725
  // Predicated region
  $region18: #{gru_model_forward.2} parent=0 // pred_check
    %p1728 = pneg %p14
  $region19: #{gru_model_forward.2} parent=0 // pred_check_branch
    %1730 = sbr.rel (%p1728) target = $region21
  $region20: #{gru_model_forward.2} parent=0 // pred_region
    %1731 = vst [vmem:[%s3] sm:$0xff] %v1724
    %1732 = vst [vmem:[%s3 + $0x8] sm:$0xff] %v1725
  $region21: #{gru_model_forward.2} parent=0 // pred_fallthru
    _
  // Predicated region
  $region22: #{gru_model_forward.2} parent=0 // pred_check
    _
  $region23: #{gru_model_forward.2} parent=0 // pred_check_branch
    %1734 = sbr.rel (0) target = $region25
  $region24: #{gru_model_forward.2} parent=0 // pred_region
    _
  $region25: #{gru_model_forward.2} parent=0 // pred_fallthru
    _
  // Predicated region
  $region26: #{gru_model_forward.2} parent=0 // pred_check
    _
  $region27: #{gru_model_forward.2} parent=0 // pred_check_branch
    %1736 = sbr.rel (0) target = $region29
  $region28: #{gru_model_forward.2} parent=0 // pred_region
    _
  $region29: #{gru_model_forward.2} parent=0 // pred_fallthru
    _

</llo_original>
